<compile_context>
chip_gen: v6e
topology: v6e:2x2x1
jax: 0.10.0
libtpu: 0.0.40
codegen_flags: <defaults>
</compile_context>

<pallas_src>
import functools

import jax
import jax.numpy as jnp
from jax import lax
from jax.experimental import pallas as pl
from jax.experimental.pallas import tpu as pltpu


def _round_up(x, m):
    return (x + m - 1) // m * m


def _cdiv(a, b):
    return -(-a // b)


def gcn_kernel(v_ref, ain_ref, aout_ref, w0_ref, w1_ref, w2_ref, b_ref,
               y_ref, a_acc, c_acc, *, bm, bk, n_valid, mask_k):
    """Grid = (row tile i [parallel], contraction tile k [arbitrary]).

    Per (i, k):    a_acc += in_mat[i, k]  @ v[k]
                   c_acc += out_mat[i, k] @ v[k]
    At k == last:  y[i] = relu(v[i] @ W0 + a_acc @ W1 + c_acc @ W2 + b)
    which equals relu(concat([v, in@v, out@v], 1) @ W + b) of the PyTorch module.
    """
    i = pl.program_id(0)
    k = pl.program_id(1)

    @pl.when(k == 0)
    def _init():
        a_acc[...] = jnp.zeros_like(a_acc)
        c_acc[...] = jnp.zeros_like(c_acc)

    cdt = v_ref.dtype  # MXU compute dtype for the dominant N^2 dots (bf16/f32)
    vk = v_ref[pl.ds(pl.multiple_of(k * bk, bk), bk), :]

    a_t = ain_ref[...]
    c_t = aout_ref[...]
    if mask_k:
        # Last contraction tile sticks out past column N: the out-of-bounds
        # region of the VMEM block holds garbage -> zero it so it cannot
        # poison valid output rows (v's padded rows are zero, but garbage
        # could be NaN/Inf).  Static no-op when N % bk == 0.
        rem = n_valid - k * bk
        col = lax.broadcasted_iota(jnp.int32, a_t.shape, 1)
        keep = col < rem
        a_t = jnp.where(keep, a_t, 0)
        c_t = jnp.where(keep, c_t, 0)

    a_acc[...] += jnp.dot(a_t.astype(cdt), vk, preferred_element_type=jnp.float32)
    c_acc[...] += jnp.dot(c_t.astype(cdt), vk, preferred_element_type=jnp.float32)

    @pl.when(k == pl.num_programs(1) - 1)
    def _finalize():
        # Epilogue (once per row tile, tiny vs the N^2 streams): all f32.
        # TODO(synk): a single stacked K=3*F_pad matmul would fill the 256-deep
        # MXU on v6e/v7x slightly better; epilogue is hidden, so skipped.
        vi = v_ref[pl.ds(pl.multiple_of(i * bm, bm), bm), :].astype(jnp.float32)
        y = jnp.dot(vi, w0_ref[...], preferred_element_type=jnp.float32)
        y += jnp.dot(a_acc[...], w1_ref[...], preferred_element_type=jnp.float32)
        y += jnp.dot(c_acc[...], w2_ref[...], preferred_element_type=jnp.float32)
        y += b_ref[...]                                        # (1, O_pad) broadcast
        y_ref[...] = jnp.maximum(y, 0.0).astype(y_ref.dtype)   # clamp(min=0)


@functools.partial(jax.jit,
                   static_argnames=("compute_dtype", "block_rows", "block_k"))
def gcn_forward(v_feat, in_mat, out_mat, weight, bias,
                compute_dtype=jnp.bfloat16, block_rows=256, block_k=1024):
    N, F = v_feat.shape
    threeF, O = weight.shape
    assert threeF == 3 * F, "weight rows must be 3 * feature_dim"

    F_pad = _round_up(F, 128)   # lane-dense feature axis
    O_pad = _round_up(O, 128)   # lane-dense output axis (unmasked vst)

    # Row tile: >= 2 tiles whenever the graph allows it (v7x has 2 TensorCores).
    bm = min(block_rows, _round_up(N, 128))
    if N > 128:
        bm = min(bm, _round_up(_cdiv(N, 2), 128))
    # Contraction tile: as long as possible (fewer grid steps, longer DMA rows).
    bk = min(block_k, _round_up(N, 128))

    gi = _cdiv(N, bm)                  # row tiles
    gk = _cdiv(N, bk)                  # contraction tiles
    Nv_pad = max(gi * bm, gk * bk)     # v rows padded so in-kernel slices stay in bounds
    Nout = gi * bm                     # padded output rows (sliced back to N)

    cdt = compute_dtype
    # v is tiny (N x F_pad): pad + cast once, keep it fully resident in VMEM.
    vp = jnp.zeros((Nv_pad, F_pad), cdt).at[:N, :F].set(v_feat.astype(cdt))
    # Weights / bias resident in f32 (a few hundred KiB), split into row blocks.
    wf = weight.astype(jnp.float32)
    w0 = jnp.zeros((F_pad, O_pad), jnp.float32).at[:F, :O].set(wf[:F])
    w1 = jnp.zeros((F_pad, O_pad), jnp.float32).at[:F, :O].set(wf[F:2 * F])
    w2 = jnp.zeros((F_pad, O_pad), jnp.float32).at[:F, :O].set(wf[2 * F:])
    bp = jnp.zeros((1, O_pad), jnp.float32)
    if bias is not None:
        bp = bp.at[0, :O].set(bias.astype(jnp.float32))

    # NOTE: in_mat / out_mat are streamed as-is (no pad/cast pre-pass over the
    # N^2 data); the kernel casts each tile to `compute_dtype` on the VPU.
    # Passing bf16 adjacency from the caller halves the dominant HBM bytes.
    # TODO(synk): int8 (v5e/v6e) / fp8 (v7x) adjacency quantization would halve
    # the byte stream again; needs a dequant scale folded into the epilogue.
    mask_k = (N % bk) != 0

    kernel = functools.partial(gcn_kernel, bm=bm, bk=bk, n_valid=N, mask_k=mask_k)

    adj_isz = jnp.dtype(in_mat.dtype).itemsize
    cdt_isz = jnp.dtype(cdt).itemsize
    vmem_need = (2 * 2 * bm * bk * adj_isz       # two adjacency streams, 2 buffers
                 + 2 * Nv_pad * F_pad * cdt_isz  # resident v
                 + 3 * 2 * F_pad * O_pad * 4     # resident weights
                 + 2 * bm * O_pad * 4            # output tile
                 + 2 * bm * F_pad * 4)           # f32 accumulators
    vmem_limit = int(min(max(2 * vmem_need, 32 * 1024 * 1024), 48 * 1024 * 1024))

    cost = pl.CostEstimate(
        flops=2 * 2 * (gi * bm) * (gk * bk) * F_pad + 2 * 3 * Nout * F_pad * O_pad,
        transcendentals=0,
        bytes_accessed=(2 * N * N * adj_isz + Nv_pad * F_pad * cdt_isz
                        + 3 * F_pad * O_pad * 4 + O_pad * 4 + Nout * O_pad * 4),
    )

    y = pl.pallas_call(
        kernel,
        out_shape=jax.ShapeDtypeStruct((Nout, O_pad), jnp.float32),
        grid_spec=pltpu.PrefetchScalarGridSpec(
            num_scalar_prefetch=0,
            grid=(gi, gk),
            in_specs=[
                pl.BlockSpec((Nv_pad, F_pad), lambda i, k: (0, 0)),   # v (VMEM-resident)
                pl.BlockSpec((bm, bk), lambda i, k: (i, k)),          # in_mat tile
                pl.BlockSpec((bm, bk), lambda i, k: (i, k)),          # out_mat tile
                pl.BlockSpec((F_pad, O_pad), lambda i, k: (0, 0)),    # W0 (resident)
                pl.BlockSpec((F_pad, O_pad), lambda i, k: (0, 0)),    # W1 (resident)
                pl.BlockSpec((F_pad, O_pad), lambda i, k: (0, 0)),    # W2 (resident)
                pl.BlockSpec((1, O_pad), lambda i, k: (0, 0)),        # bias (f32)
            ],
            out_specs=pl.BlockSpec((bm, O_pad), lambda i, k: (i, 0)),
            scratch_shapes=[pltpu.VMEM((bm, F_pad), jnp.float32),     # in_mat @ v acc
                            pltpu.VMEM((bm, F_pad), jnp.float32)],    # out_mat @ v acc
        ),
        compiler_params=pltpu.CompilerParams(
            dimension_semantics=("parallel", "arbitrary"),
            vmem_limit_bytes=vmem_limit,
        ),
        cost_estimate=cost,
    )(vp, in_mat, out_mat, w0, w1, w2, bp)

    return y[:N, :O]


def gcn_reference(v_feat, in_mat, out_mat, weight, bias):
    h = jnp.concatenate([v_feat, in_mat @ v_feat, out_mat @ v_feat], axis=1)
    y = h @ weight
    if bias is not None:
        y = y + bias
    return jnp.maximum(y, 0.0)


if __name__ == "__main__":
    root = jax.random.PRNGKey(0)
    key_a, key_b = jax.random.split(root)

    # ---- Test 1: the module's toy shapes, exact f32 semantics ---------------
    N, F, O = 8, 16, 32
    k1, k2, k3, k4, k5 = jax.random.split(key_a, 5)
    v_feat = jax.random.normal(k1, (N, F), dtype=jnp.float32)
    in_mat = jax.random.normal(k2, (N, N), dtype=jnp.float32)
    out_mat = jax.random.normal(k3, (N, N), dtype=jnp.float32)
    weight = jax.random.normal(k4, (3 * F, O), dtype=jnp.float32)
    bias = jax.random.normal(k5, (O,), dtype=jnp.float32)

    out = jax.block_until_ready(
        gcn_forward(v_feat, in_mat, out_mat, weight, bias,
                    compute_dtype=jnp.float32))
    ref = gcn_reference(v_feat, in_mat, out_mat, weight, bias)
    assert out.shape == (N, O)
    assert jnp.allclose(out, ref, atol=5e-4, rtol=5e-4), "f32 mismatch vs reference"

    # ---- Test 2: ragged N (not a multiple of 128) -> multi-tile grid,
    #      multi-step contraction with edge masking, bf16 MXU fast path -------
    N2, F2, O2 = 520, 48, 80
    k1, k2, k3, k4, k5 = jax.random.split(key_b, 5)
    v2 = jax.random.normal(k1, (N2, F2), dtype=jnp.float32)
    in2 = jax.random.normal(k2, (N2, N2), dtype=jnp.float32)
    ou2 = jax.random.normal(k3, (N2, N2), dtype=jnp.float32)
    w2 = jax.random.normal(k4, (3 * F2, O2), dtype=jnp.float32)
    b2 = jax.random.normal(k5, (O2,), dtype=jnp.float32)

    got = jax.block_until_ready(
        gcn_forward(v2, in2, ou2, w2, b2, compute_dtype=jnp.bfloat16,
                    block_rows=256, block_k=256))
    ref2 = gcn_reference(v2, in2, ou2, w2, b2)
    assert got.shape == (N2, O2)
    scale = jnp.max(jnp.abs(ref2)) + 1e-6
    rel_err = jnp.max(jnp.abs(got - ref2)) / scale
    assert rel_err < 3e-2, f"bf16 mismatch: scaled max error {rel_err}"

    print("KERNEL_OK")
</pallas_src>

<mosaic_0001>
module attributes {stable_mosaic.version = 11 : i64} {
  func.func @gcn_kernel(%arg0: i32, %arg1: i32, %arg2: memref<128x128xf32, #tpu.memory_space<vmem>>, %arg3: memref<128x128xf32, #tpu.memory_space<vmem>>, %arg4: memref<128x128xf32, #tpu.memory_space<vmem>>, %arg5: memref<128x128xf32, #tpu.memory_space<vmem>>, %arg6: memref<128x128xf32, #tpu.memory_space<vmem>>, %arg7: memref<128x128xf32, #tpu.memory_space<vmem>>, %arg8: memref<1x128xf32, #tpu.memory_space<vmem>>, %arg9: memref<128x128xf32, #tpu.memory_space<vmem>>, %arg10: memref<128x128xf32, #tpu.memory_space<vmem>>, %arg11: memref<128x128xf32, #tpu.memory_space<vmem>>) attributes {dimension_semantics = [#tpu.dimension_semantics<parallel>, #tpu.dimension_semantics<arbitrary>], iteration_bounds = array<i64: 1, 1>, scalar_prefetch = 0 : i64, scratch_operands = 2 : i64, tpu.core_type = #tpu.core_type<tc>, window_params = [{pipeline_mode = #tpu.pipeline_mode<synchronous>, transform_indices = @transform_0, window_bounds = array<i64: 128, 128>}, {transform_indices = @transform_1, window_bounds = array<i64: 128, 128>}, {transform_indices = @transform_2, window_bounds = array<i64: 128, 128>}, {pipeline_mode = #tpu.pipeline_mode<synchronous>, transform_indices = @transform_3, window_bounds = array<i64: 128, 128>}, {pipeline_mode = #tpu.pipeline_mode<synchronous>, transform_indices = @transform_4, window_bounds = array<i64: 128, 128>}, {pipeline_mode = #tpu.pipeline_mode<synchronous>, transform_indices = @transform_5, window_bounds = array<i64: 128, 128>}, {pipeline_mode = #tpu.pipeline_mode<synchronous>, transform_indices = @transform_6, window_bounds = array<i64: 1, 128>}, {transform_indices = @transform_7, window_bounds = array<i64: 128, 128>}]} {
    %c0_i32 = arith.constant 0 : i32
    %0 = arith.cmpi eq, %arg1, %c0_i32 : i32
    %1 = arith.extui %0 : i1 to i32
    %c0_i32_0 = arith.constant 0 : i32
    %2 = arith.cmpi ne, %1, %c0_i32_0 : i32
    scf.if %2 {
      %cst_19 = arith.constant 0.000000e+00 : f32
      %31 = vector.broadcast %cst_19 : f32 to vector<128x128xf32>
      %c0_20 = arith.constant 0 : index
      %c0_21 = arith.constant 0 : index
      %32 = vector.load %arg10[%c0_20, %c0_21] : memref<128x128xf32, #tpu.memory_space<vmem>>, vector<128x128xf32>
      tpu.vector_store %arg10[%c0_20, %c0_21], %31 {strides = array<i32>} : memref<128x128xf32, #tpu.memory_space<vmem>>, vector<128x128xf32>,
      %cst_22 = arith.constant 0.000000e+00 : f32
      %33 = vector.broadcast %cst_22 : f32 to vector<128x128xf32>
      %c0_23 = arith.constant 0 : index
      %c0_24 = arith.constant 0 : index
      %34 = vector.load %arg11[%c0_23, %c0_24] : memref<128x128xf32, #tpu.memory_space<vmem>>, vector<128x128xf32>
      tpu.vector_store %arg11[%c0_23, %c0_24], %33 {strides = array<i32>} : memref<128x128xf32, #tpu.memory_space<vmem>>, vector<128x128xf32>,
    } else {
    }
    %c128_i32 = arith.constant 128 : i32
    %3 = arith.muli %arg1, %c128_i32 : i32
    %4 = tpu.assume_multiple %3, 128 : i32
    %5 = arith.index_cast %4 : i32 to index
    %c0 = arith.constant 0 : index
    %6 = vector.load %arg2[%5, %c0] : memref<128x128xf32, #tpu.memory_space<vmem>>, vector<128x128xf32>
    %c0_1 = arith.constant 0 : index
    %c0_2 = arith.constant 0 : index
    %7 = vector.load %arg3[%c0_1, %c0_2] : memref<128x128xf32, #tpu.memory_space<vmem>>, vector<128x128xf32>
    %c0_3 = arith.constant 0 : index
    %c0_4 = arith.constant 0 : index
    %8 = vector.load %arg4[%c0_3, %c0_4] : memref<128x128xf32, #tpu.memory_space<vmem>>, vector<128x128xf32>
    %c128_i32_5 = arith.constant 128 : i32
    %9 = arith.muli %arg1, %c128_i32_5 : i32
    %c8_i32 = arith.constant 8 : i32
    %10 = arith.subi %c8_i32, %9 : i32
    %11 = tpu.iota {dimensions = array<i32: 1>} : vector<128x128xi32>
    %12 = vector.broadcast %10 : i32 to vector<128x128xi32>
    %13 = arith.cmpi slt, %11, %12 : vector<128x128xi32>
    %c0_i32_6 = arith.constant 0 : i32
    %14 = arith.sitofp %c0_i32_6 : i32 to f32
    %15 = vector.broadcast %14 : f32 to vector<128x128xf32>
    %16 = arith.select %13, %7, %15 : vector<128x128xi1>, vector<128x128xf32>
    %c0_i32_7 = arith.constant 0 : i32
    %17 = arith.sitofp %c0_i32_7 : i32 to f32
    %18 = vector.broadcast %17 : f32 to vector<128x128xf32>
    %19 = arith.select %13, %8, %18 : vector<128x128xi1>, vector<128x128xf32>
    %c0_8 = arith.constant 0 : index
    %c0_9 = arith.constant 0 : index
    %20 = vector.load %arg10[%c0_8, %c0_9] : memref<128x128xf32, #tpu.memory_space<vmem>>, vector<128x128xf32>
    %cst = arith.constant dense<0.000000e+00> : vector<128x128xf32>
    %21 = tpu.matmul %16, %6, %cst {dimension_numbers = #tpu.dot_dimension_numbers<[1], [0], [0], [1], [0, 0, 1, 1], [], []>} : vector<128x128xf32>, vector<128x128xf32>, vector<128x128xf32> -> vector<128x128xf32>
    %22 = arith.addf %20, %21 : vector<128x128xf32>
    %c0_10 = arith.constant 0 : index
    %c0_11 = arith.constant 0 : index
    %23 = vector.load %arg10[%c0_10, %c0_11] : memref<128x128xf32, #tpu.memory_space<vmem>>, vector<128x128xf32>
    tpu.vector_store %arg10[%c0_10, %c0_11], %22 {strides = array<i32>} : memref<128x128xf32, #tpu.memory_space<vmem>>, vector<128x128xf32>,
    %c0_12 = arith.constant 0 : index
    %c0_13 = arith.constant 0 : index
    %24 = vector.load %arg11[%c0_12, %c0_13] : memref<128x128xf32, #tpu.memory_space<vmem>>, vector<128x128xf32>
    %cst_14 = arith.constant dense<0.000000e+00> : vector<128x128xf32>
    %25 = tpu.matmul %19, %6, %cst_14 {dimension_numbers = #tpu.dot_dimension_numbers<[1], [0], [0], [1], [0, 0, 1, 1], [], []>} : vector<128x128xf32>, vector<128x128xf32>, vector<128x128xf32> -> vector<128x128xf32>
    %26 = arith.addf %24, %25 : vector<128x128xf32>
    %c0_15 = arith.constant 0 : index
    %c0_16 = arith.constant 0 : index
    %27 = vector.load %arg11[%c0_15, %c0_16] : memref<128x128xf32, #tpu.memory_space<vmem>>, vector<128x128xf32>
    tpu.vector_store %arg11[%c0_15, %c0_16], %26 {strides = array<i32>} : memref<128x128xf32, #tpu.memory_space<vmem>>, vector<128x128xf32>,
    %c0_i32_17 = arith.constant 0 : i32
    %28 = arith.cmpi eq, %arg1, %c0_i32_17 : i32
    %29 = arith.extui %28 : i1 to i32
    %c0_i32_18 = arith.constant 0 : i32
    %30 = arith.cmpi ne, %29, %c0_i32_18 : i32
    scf.if %30 {
      %c128_i32_19 = arith.constant 128 : i32
      %31 = arith.muli %arg0, %c128_i32_19 : i32
      %32 = tpu.assume_multiple %31, 128 : i32
      %33 = arith.index_cast %32 : i32 to index
      %c0_20 = arith.constant 0 : index
      %34 = vector.load %arg2[%33, %c0_20] : memref<128x128xf32, #tpu.memory_space<vmem>>, vector<128x128xf32>
      %c0_21 = arith.constant 0 : index
      %c0_22 = arith.constant 0 : index
      %35 = vector.load %arg5[%c0_21, %c0_22] : memref<128x128xf32, #tpu.memory_space<vmem>>, vector<128x128xf32>
      %cst_23 = arith.constant dense<0.000000e+00> : vector<128x128xf32>
      %36 = tpu.matmul %34, %35, %cst_23 {dimension_numbers = #tpu.dot_dimension_numbers<[1], [0], [0], [1], [0, 0, 1, 1], [], []>} : vector<128x128xf32>, vector<128x128xf32>, vector<128x128xf32> -> vector<128x128xf32>
      %c0_24 = arith.constant 0 : index
      %c0_25 = arith.constant 0 : index
      %37 = vector.load %arg10[%c0_24, %c0_25] : memref<128x128xf32, #tpu.memory_space<vmem>>, vector<128x128xf32>
      %c0_26 = arith.constant 0 : index
      %c0_27 = arith.constant 0 : index
      %38 = vector.load %arg6[%c0_26, %c0_27] : memref<128x128xf32, #tpu.memory_space<vmem>>, vector<128x128xf32>
      %cst_28 = arith.constant dense<0.000000e+00> : vector<128x128xf32>
      %39 = tpu.matmul %37, %38, %cst_28 {dimension_numbers = #tpu.dot_dimension_numbers<[1], [0], [0], [1], [0, 0, 1, 1], [], []>} : vector<128x128xf32>, vector<128x128xf32>, vector<128x128xf32> -> vector<128x128xf32>
      %40 = arith.addf %36, %39 : vector<128x128xf32>
      %c0_29 = arith.constant 0 : index
      %c0_30 = arith.constant 0 : index
      %41 = vector.load %arg11[%c0_29, %c0_30] : memref<128x128xf32, #tpu.memory_space<vmem>>, vector<128x128xf32>
      %c0_31 = arith.constant 0 : index
      %c0_32 = arith.constant 0 : index
      %42 = vector.load %arg7[%c0_31, %c0_32] : memref<128x128xf32, #tpu.memory_space<vmem>>, vector<128x128xf32>
      %cst_33 = arith.constant dense<0.000000e+00> : vector<128x128xf32>
      %43 = tpu.matmul %41, %42, %cst_33 {dimension_numbers = #tpu.dot_dimension_numbers<[1], [0], [0], [1], [0, 0, 1, 1], [], []>} : vector<128x128xf32>, vector<128x128xf32>, vector<128x128xf32> -> vector<128x128xf32>
      %44 = arith.addf %40, %43 : vector<128x128xf32>
      %c0_34 = arith.constant 0 : index
      %c0_35 = arith.constant 0 : index
      %45 = vector.load %arg8[%c0_34, %c0_35] : memref<1x128xf32, #tpu.memory_space<vmem>>, vector<1x128xf32>
      %46 = vector.broadcast %45 : vector<1x128xf32> to vector<128x128xf32>
      %47 = arith.addf %44, %46 : vector<128x128xf32>
      %cst_36 = arith.constant 0.000000e+00 : f32
      %48 = vector.broadcast %cst_36 : f32 to vector<128x128xf32>
      %49 = arith.maximumf %47, %48 : vector<128x128xf32>
      %c0_37 = arith.constant 0 : index
      %c0_38 = arith.constant 0 : index
      %50 = vector.load %arg9[%c0_37, %c0_38] : memref<128x128xf32, #tpu.memory_space<vmem>>, vector<128x128xf32>
      tpu.vector_store %arg9[%c0_37, %c0_38], %49 {strides = array<i32>} : memref<128x128xf32, #tpu.memory_space<vmem>>, vector<128x128xf32>,
    } else {
    }
    return
  }
  func.func @transform_0(%arg0: i32, %arg1: i32) -> (i32, i32) {
    %c0_i32 = arith.constant 0 : i32
    %c0_i32_0 = arith.constant 0 : i32
    %c0_i32_1 = arith.constant 0 : i32
    return %c0_i32, %c0_i32_0 : i32, i32
  }
  func.func @transform_1(%arg0: i32, %arg1: i32) -> (i32, i32) {
    %c0_i32 = arith.constant 0 : i32
    return %arg0, %arg1 : i32, i32
  }
  func.func @transform_2(%arg0: i32, %arg1: i32) -> (i32, i32) {
    %c0_i32 = arith.constant 0 : i32
    return %arg0, %arg1 : i32, i32
  }
  func.func @transform_3(%arg0: i32, %arg1: i32) -> (i32, i32) {
    %c0_i32 = arith.constant 0 : i32
    %c0_i32_0 = arith.constant 0 : i32
    %c0_i32_1 = arith.constant 0 : i32
    return %c0_i32, %c0_i32_0 : i32, i32
  }
  func.func @transform_4(%arg0: i32, %arg1: i32) -> (i32, i32) {
    %c0_i32 = arith.constant 0 : i32
    %c0_i32_0 = arith.constant 0 : i32
    %c0_i32_1 = arith.constant 0 : i32
    return %c0_i32, %c0_i32_0 : i32, i32
  }
  func.func @transform_5(%arg0: i32, %arg1: i32) -> (i32, i32) {
    %c0_i32 = arith.constant 0 : i32
    %c0_i32_0 = arith.constant 0 : i32
    %c0_i32_1 = arith.constant 0 : i32
    return %c0_i32, %c0_i32_0 : i32, i32
  }
  func.func @transform_6(%arg0: i32, %arg1: i32) -> (i32, i32) {
    %c0_i32 = arith.constant 0 : i32
    %c0_i32_0 = arith.constant 0 : i32
    %c0_i32_1 = arith.constant 0 : i32
    return %c0_i32, %c0_i32_0 : i32, i32
  }
  func.func @transform_7(%arg0: i32, %arg1: i32) -> (i32, i32) {
    %c0_i32 = arith.constant 0 : i32
    %c0_i32_0 = arith.constant 0 : i32
    return %arg0, %c0_i32 : i32, i32
  }
}

</mosaic_0001>

<llo_original>
// kernel: gcn_forward.1
$region0: #{gcn_forward.1}
  #allocation0 [shape = 'u32[]', space=smem, size = 0x4, offset = 0x4, fixed_abs, tag = 'smem constant byte address 0x4 - core index']
  #allocation1 [shape = 'u32[144,128]{1,0:T(1,128)}', space=vmem, size = 0x12000, scoped, tag = 'internal scratch']
  #allocation2 [shape = 'f32[128,128]{1,0:T(8,128)}', space=vmem, size = 0x10000, scoped, tag = 'scratch operand']
  #allocation3 [shape = 'f32[128,128]{1,0:T(8,128)}', space=vmem, size = 0x10000, scoped, tag = 'scratch operand']
  %s0 = inlined_call_operand.vmem [shape: f32[128,128], index: 0, kind: input, shape index: {}]
  %s1 = inlined_call_operand.vmem [shape: f32[8,8], index: 1, kind: input, shape index: {}]
  %s2 = inlined_call_operand.vmem [shape: f32[8,8], index: 2, kind: input, shape index: {}]
  %s3 = inlined_call_operand.vmem [shape: f32[128,128], index: 3, kind: input, shape index: {}]
  %s4 = inlined_call_operand.vmem [shape: f32[128,128], index: 4, kind: input, shape index: {}]
  %s5 = inlined_call_operand.vmem [shape: f32[128,128], index: 5, kind: input, shape index: {}]
  %s6 = inlined_call_operand.vmem [shape: f32[1,128], index: 6, kind: input, shape index: {}]
  %s7 = inlined_call_operand.vmem [shape: f32[128,128], index: 7, kind: output, shape index: {}]
  %s8 = sld [smem:[#allocation0]]
  $region46: #{gcn_forward.1} parent=0
    _
  %s10 = ssub.s32 1, %s8
  %s11 = scalar_select 0, %s10, %s8
  // Predicated region
  $region2: #{gcn_forward.1} parent=0 // pred_check
    _
  $region3: #{gcn_forward.1} parent=0 // pred_check_branch
    %13 = sbr.rel (0) target = $region5
  $region4: #{gcn_forward.1} parent=0 // pred_region
    _
  $region5: #{gcn_forward.1} parent=0 // pred_fallthru
    _
  // Predicated region
  $region6: #{gcn_forward.1} parent=0 // pred_check
    _
  $region7: #{gcn_forward.1} parent=0 // pred_check_branch
    %15 = sbr.rel (0) target = $region9
  $region8: #{gcn_forward.1} parent=0 // pred_region
    _
  $region9: #{gcn_forward.1} parent=0 // pred_fallthru
    _
  // Predicated region
  $region10: #{gcn_forward.1} parent=0 // pred_check
    _
  $region11: #{gcn_forward.1} parent=0 // pred_check_branch
    %17 = sbr.rel (0) target = $region13
  $region12: #{gcn_forward.1} parent=0 // pred_region
    _
  $region13: #{gcn_forward.1} parent=0 // pred_fallthru
    _
  // Predicated region
  $region14: #{gcn_forward.1} parent=0 // pred_check
    _
  $region15: #{gcn_forward.1} parent=0 // pred_check_branch
    %19 = sbr.rel (0) target = $region17
  $region16: #{gcn_forward.1} parent=0 // pred_region
    _
  $region17: #{gcn_forward.1} parent=0 // pred_fallthru
    _
  // Predicated region
  $region18: #{gcn_forward.1} parent=0 // pred_check
    _
  $region19: #{gcn_forward.1} parent=0 // pred_check_branch
    %21 = sbr.rel (0) target = $region21
  $region20: #{gcn_forward.1} parent=0 // pred_region
    _
  $region21: #{gcn_forward.1} parent=0 // pred_fallthru
    _
  // Predicated region
  $region22: #{gcn_forward.1} parent=0 // pred_check
    _
  $region23: #{gcn_forward.1} parent=0 // pred_check_branch
    %23 = sbr.rel (0) target = $region25
  $region24: #{gcn_forward.1} parent=0 // pred_region
    _
  $region25: #{gcn_forward.1} parent=0 // pred_fallthru
    _
  // Predicated region
  $region26: #{gcn_forward.1} parent=0 // pred_check
    _
  $region27: #{gcn_forward.1} parent=0 // pred_check_branch
    %25 = sbr.rel (0) target = $region29
  $region28: #{gcn_forward.1} parent=0 // pred_region
    _
  $region29: #{gcn_forward.1} parent=0 // pred_fallthru
    _
  %p26 = scmp.eq.s32.totalorder 0, 0
  // Predicated region
  $region30: #{gcn_forward.1} parent=0 // pred_check
    %p27 = pneg %p26
  $region31: #{gcn_forward.1} parent=0 // pred_check_branch
    %29 = sbr.rel (%p27) target = $region33
  $region32: #{gcn_forward.1} parent=0 // pred_region
    %30 = vst [vmem:[#allocation2] sm:$0xff] 0.0
    %31 = vst [vmem:[#allocation2 + $0x8] sm:$0xff] 0.0
    %32 = vst [vmem:[#allocation2 + $0x10] sm:$0xff] 0.0
    %33 = vst [vmem:[#allocation2 + $0x18] sm:$0xff] 0.0
    %34 = vst [vmem:[#allocation2 + $0x20] sm:$0xff] 0.0
    %35 = vst [vmem:[#allocation2 + $0x28] sm:$0xff] 0.0
    %36 = vst [vmem:[#allocation2 + $0x30] sm:$0xff] 0.0
    %37 = vst [vmem:[#allocation2 + $0x38] sm:$0xff] 0.0
    %38 = vst [vmem:[#allocation2 + $0x40] sm:$0xff] 0.0
    %39 = vst [vmem:[#allocation2 + $0x48] sm:$0xff] 0.0
    %40 = vst [vmem:[#allocation2 + $0x50] sm:$0xff] 0.0
    %41 = vst [vmem:[#allocation2 + $0x58] sm:$0xff] 0.0
    %42 = vst [vmem:[#allocation2 + $0x60] sm:$0xff] 0.0
    %43 = vst [vmem:[#allocation2 + $0x68] sm:$0xff] 0.0
    %44 = vst [vmem:[#allocation2 + $0x70] sm:$0xff] 0.0
    %45 = vst [vmem:[#allocation2 + $0x78] sm:$0xff] 0.0
    %46 = vst [vmem:[#allocation3] sm:$0xff] 0.0
    %47 = vst [vmem:[#allocation3 + $0x8] sm:$0xff] 0.0
    %48 = vst [vmem:[#allocation3 + $0x10] sm:$0xff] 0.0
    %49 = vst [vmem:[#allocation3 + $0x18] sm:$0xff] 0.0
    %50 = vst [vmem:[#allocation3 + $0x20] sm:$0xff] 0.0
    %51 = vst [vmem:[#allocation3 + $0x28] sm:$0xff] 0.0
    %52 = vst [vmem:[#allocation3 + $0x30] sm:$0xff] 0.0
    %53 = vst [vmem:[#allocation3 + $0x38] sm:$0xff] 0.0
    %54 = vst [vmem:[#allocation3 + $0x40] sm:$0xff] 0.0
    %55 = vst [vmem:[#allocation3 + $0x48] sm:$0xff] 0.0
    %56 = vst [vmem:[#allocation3 + $0x50] sm:$0xff] 0.0
    %57 = vst [vmem:[#allocation3 + $0x58] sm:$0xff] 0.0
    %58 = vst [vmem:[#allocation3 + $0x60] sm:$0xff] 0.0
    %59 = vst [vmem:[#allocation3 + $0x68] sm:$0xff] 0.0
    %60 = vst [vmem:[#allocation3 + $0x70] sm:$0xff] 0.0
    %61 = vst [vmem:[#allocation3 + $0x78] sm:$0xff] 0.0
  $region33: #{gcn_forward.1} parent=0 // pred_fallthru
    _
  %s62 = smul.u32 0, 128
  %s63 = scalar_lea.vmem %s0, %s62
  %v64 = vld [vmem:[%s63] sm:$0xff]
  %v65 = vld [vmem:[%s63 + $0x8] sm:$0xff]
  %v66 = vld [vmem:[%s63 + $0x10] sm:$0xff]
  %v67 = vld [vmem:[%s63 + $0x18] sm:$0xff]
  %v68 = vld [vmem:[%s63 + $0x20] sm:$0xff]
  %v69 = vld [vmem:[%s63 + $0x28] sm:$0xff]
  %v70 = vld [vmem:[%s63 + $0x30] sm:$0xff]
  %v71 = vld [vmem:[%s63 + $0x38] sm:$0xff]
  %v72 = vld [vmem:[%s63 + $0x40] sm:$0xff]
  %v73 = vld [vmem:[%s63 + $0x48] sm:$0xff]
  %v74 = vld [vmem:[%s63 + $0x50] sm:$0xff]
  %v75 = vld [vmem:[%s63 + $0x58] sm:$0xff]
  %v76 = vld [vmem:[%s63 + $0x60] sm:$0xff]
  %v77 = vld [vmem:[%s63 + $0x68] sm:$0xff]
  %v78 = vld [vmem:[%s63 + $0x70] sm:$0xff]
  %v79 = vld [vmem:[%s63 + $0x78] sm:$0xff]
  %v80 = vld [vmem:[%s1] sm:$0xff]
  %v81 = vld [vmem:[%s1 + $0x8] sm:$0xff]
  %v82 = vld [vmem:[%s1 + $0x10] sm:$0xff]
  %v83 = vld [vmem:[%s1 + $0x18] sm:$0xff]
  %v84 = vld [vmem:[%s1 + $0x20] sm:$0xff]
  %v85 = vld [vmem:[%s1 + $0x28] sm:$0xff]
  %v86 = vld [vmem:[%s1 + $0x30] sm:$0xff]
  %v87 = vld [vmem:[%s1 + $0x38] sm:$0xff]
  %v88 = vld [vmem:[%s1 + $0x40] sm:$0xff]
  %v89 = vld [vmem:[%s1 + $0x48] sm:$0xff]
  %v90 = vld [vmem:[%s1 + $0x50] sm:$0xff]
  %v91 = vld [vmem:[%s1 + $0x58] sm:$0xff]
  %v92 = vld [vmem:[%s1 + $0x60] sm:$0xff]
  %v93 = vld [vmem:[%s1 + $0x68] sm:$0xff]
  %v94 = vld [vmem:[%s1 + $0x70] sm:$0xff]
  %v95 = vld [vmem:[%s1 + $0x78] sm:$0xff]
  %v96 = vld [vmem:[%s2] sm:$0xff]
  %v97 = vld [vmem:[%s2 + $0x8] sm:$0xff]
  %v98 = vld [vmem:[%s2 + $0x10] sm:$0xff]
  %v99 = vld [vmem:[%s2 + $0x18] sm:$0xff]
  %v100 = vld [vmem:[%s2 + $0x20] sm:$0xff]
  %v101 = vld [vmem:[%s2 + $0x28] sm:$0xff]
  %v102 = vld [vmem:[%s2 + $0x30] sm:$0xff]
  %v103 = vld [vmem:[%s2 + $0x38] sm:$0xff]
  %v104 = vld [vmem:[%s2 + $0x40] sm:$0xff]
  %v105 = vld [vmem:[%s2 + $0x48] sm:$0xff]
  %v106 = vld [vmem:[%s2 + $0x50] sm:$0xff]
  %v107 = vld [vmem:[%s2 + $0x58] sm:$0xff]
  %v108 = vld [vmem:[%s2 + $0x60] sm:$0xff]
  %v109 = vld [vmem:[%s2 + $0x68] sm:$0xff]
  %v110 = vld [vmem:[%s2 + $0x70] sm:$0xff]
  %v111 = vld [vmem:[%s2 + $0x78] sm:$0xff]
  %s112 = ssub.s32 8, %s62
  %v113 = vlaneseq
  %v114 = vand.u32 %v113, 127
  %v115 = vstv %s112
  %vm116 = vcmp.lt.s32.totalorder %v114, %v115
  %v117 = vsel %vm116, %v80, 0.0
  %v118 = vsel %vm116, %v81, 0.0
  %v119 = vsel %vm116, %v82, 0.0
  %v120 = vsel %vm116, %v83, 0.0
  %v121 = vsel %vm116, %v84, 0.0
  %v122 = vsel %vm116, %v85, 0.0
  %v123 = vsel %vm116, %v86, 0.0
  %v124 = vsel %vm116, %v87, 0.0
  %v125 = vsel %vm116, %v88, 0.0
  %v126 = vsel %vm116, %v89, 0.0
  %v127 = vsel %vm116, %v90, 0.0
  %v128 = vsel %vm116, %v91, 0.0
  %v129 = vsel %vm116, %v92, 0.0
  %v130 = vsel %vm116, %v93, 0.0
  %v131 = vsel %vm116, %v94, 0.0
  %v132 = vsel %vm116, %v95, 0.0
  %v133 = vsel %vm116, %v96, 0.0
  %v134 = vsel %vm116, %v97, 0.0
  %v135 = vsel %vm116, %v98, 0.0
  %v136 = vsel %vm116, %v99, 0.0
  %v137 = vsel %vm116, %v100, 0.0
  %v138 = vsel %vm116, %v101, 0.0
  %v139 = vsel %vm116, %v102, 0.0
  %v140 = vsel %vm116, %v103, 0.0
  %v141 = vsel %vm116, %v104, 0.0
  %v142 = vsel %vm116, %v105, 0.0
  %v143 = vsel %vm116, %v106, 0.0
  %v144 = vsel %vm116, %v107, 0.0
  %v145 = vsel %vm116, %v108, 0.0
  %v146 = vsel %vm116, %v109, 0.0
  %v147 = vsel %vm116, %v110, 0.0
  %v148 = vsel %vm116, %v111, 0.0
  %v149 = vld [vmem:[#allocation2] sm:$0xff]
  %v150 = vld [vmem:[#allocation2 + $0x8] sm:$0xff]
  %v151 = vld [vmem:[#allocation2 + $0x10] sm:$0xff]
  %v152 = vld [vmem:[#allocation2 + $0x18] sm:$0xff]
  %v153 = vld [vmem:[#allocation2 + $0x20] sm:$0xff]
  %v154 = vld [vmem:[#allocation2 + $0x28] sm:$0xff]
  %v155 = vld [vmem:[#allocation2 + $0x30] sm:$0xff]
  %v156 = vld [vmem:[#allocation2 + $0x38] sm:$0xff]
  %v157 = vld [vmem:[#allocation2 + $0x40] sm:$0xff]
  %v158 = vld [vmem:[#allocation2 + $0x48] sm:$0xff]
  %v159 = vld [vmem:[#allocation2 + $0x50] sm:$0xff]
  %v160 = vld [vmem:[#allocation2 + $0x58] sm:$0xff]
  %v161 = vld [vmem:[#allocation2 + $0x60] sm:$0xff]
  %v162 = vld [vmem:[#allocation2 + $0x68] sm:$0xff]
  %v163 = vld [vmem:[#allocation2 + $0x70] sm:$0xff]
  %v164 = vld [vmem:[#allocation2 + $0x78] sm:$0xff]
  %165 = vmatprep.subr.mxu0 0.0
  %166 = vmatpush1.msra.mxu0 %v79
  %167 = vmatprep.subr.mxu0 0.0
  %168 = vmatpush1.msra.mxu0 %v78
  %169 = vmatprep.subr.mxu0 0.0
  %170 = vmatpush1.msra.mxu0 %v77
  %171 = vmatprep.subr.mxu0 0.0
  %172 = vmatpush1.msra.mxu0 %v76
  %173 = vmatprep.subr.mxu0 0.0
  %174 = vmatpush1.msra.mxu0 %v75
  %175 = vmatprep.subr.mxu0 0.0
  %176 = vmatpush1.msra.mxu0 %v74
  %177 = vmatprep.subr.mxu0 0.0
  %178 = vmatpush1.msra.mxu0 %v73
  %179 = vmatprep.subr.mxu0 0.0
  %180 = vmatpush1.msra.mxu0 %v72
  %181 = vmatprep.subr.mxu0 0.0
  %182 = vmatpush1.msra.mxu0 %v71
  %183 = vmatprep.subr.mxu0 0.0
  %184 = vmatpush1.msra.mxu0 %v70
  %185 = vmatprep.subr.mxu0 0.0
  %186 = vmatpush1.msra.mxu0 %v69
  %187 = vmatprep.subr.mxu0 0.0
  %188 = vmatpush1.msra.mxu0 %v68
  %189 = vmatprep.subr.mxu0 0.0
  %190 = vmatpush1.msra.mxu0 %v67
  %191 = vmatprep.subr.mxu0 0.0
  %192 = vmatpush1.msra.mxu0 %v66
  %193 = vmatprep.subr.mxu0 0.0
  %194 = vmatpush1.msra.mxu0 %v65
  %195 = vmatprep.subr.mxu0 0.0
  %196 = vmatpush1.msra.mxu0 %v64
  %197 = vmatprep.subr.mxu0 0.0
  %198 = vmatpush2.msra.mxu0 0.0
  %199 = vmatprep.subr.mxu0 0.0
  %200 = vmatpush2.msra.mxu0 0.0
  %201 = vmatprep.subr.mxu0 0.0
  %202 = vmatpush2.msra.mxu0 0.0
  %203 = vmatprep.subr.mxu0 0.0
  %204 = vmatpush2.msra.mxu0 0.0
  %205 = vmatprep.subr.mxu0 0.0
  %206 = vmatpush2.msra.mxu0 0.0
  %207 = vmatprep.subr.mxu0 0.0
  %208 = vmatpush2.msra.mxu0 0.0
  %209 = vmatprep.subr.mxu0 0.0
  %210 = vmatpush2.msra.mxu0 0.0
  %211 = vmatprep.subr.mxu0 0.0
  %212 = vmatpush2.msra.mxu0 0.0
  %213 = vmatprep.subr.mxu0 0.0
  %214 = vmatpush2.msra.mxu0 0.0
  %215 = vmatprep.subr.mxu0 0.0
  %216 = vmatpush2.msra.mxu0 0.0
  %217 = vmatprep.subr.mxu0 0.0
  %218 = vmatpush2.msra.mxu0 0.0
  %219 = vmatprep.subr.mxu0 0.0
  %220 = vmatpush2.msra.mxu0 0.0
  %221 = vmatprep.subr.mxu0 0.0
  %222 = vmatpush2.msra.mxu0 0.0
  %223 = vmatprep.subr.mxu0 0.0
  %224 = vmatpush2.msra.mxu0 0.0
  %225 = vmatprep.subr.mxu0 0.0
  %226 = vmatpush2.msra.mxu0 0.0
  %227 = vmatprep.subr.mxu0 0.0
  %228 = vmatpush2.msra.mxu0 0.0
  %229 = vmatprep.mubr.f32.mxu0 0.0
  %230 = vmatmul.mubr.f32.gmra.mxu0 %v117
  %v231 = vpop.f32.mrf.mxu0
  %v232 = vadd.f32 0.0, %v231
  %v233 = vpop.f32.mrf.mxu0
  %234 = vmatprep.mubr.f32.mxu0 0.0
  %235 = vmatmul.mubr.f32.gmra.mxu0 %v118
  %v236 = vpop.f32.mrf.mxu0
  %v237 = vadd.f32 0.0, %v236
  %v238 = vpop.f32.mrf.mxu0
  %239 = vmatprep.mubr.f32.mxu0 0.0
  %240 = vmatmul.mubr.f32.gmra.mxu0 %v119
  %v241 = vpop.f32.mrf.mxu0
  %v242 = vadd.f32 0.0, %v241
  %v243 = vpop.f32.mrf.mxu0
  %244 = vmatprep.mubr.f32.mxu0 0.0
  %245 = vmatmul.mubr.f32.gmra.mxu0 %v120
  %v246 = vpop.f32.mrf.mxu0
  %v247 = vadd.f32 0.0, %v246
  %v248 = vpop.f32.mrf.mxu0
  %249 = vmatprep.mubr.f32.mxu0 0.0
  %250 = vmatmul.mubr.f32.gmra.mxu0 %v121
  %v251 = vpop.f32.mrf.mxu0
  %v252 = vadd.f32 0.0, %v251
  %v253 = vpop.f32.mrf.mxu0
  %254 = vmatprep.mubr.f32.mxu0 0.0
  %255 = vmatmul.mubr.f32.gmra.mxu0 %v122
  %v256 = vpop.f32.mrf.mxu0
  %v257 = vadd.f32 0.0, %v256
  %v258 = vpop.f32.mrf.mxu0
  %259 = vmatprep.mubr.f32.mxu0 0.0
  %260 = vmatmul.mubr.f32.gmra.mxu0 %v123
  %v261 = vpop.f32.mrf.mxu0
  %v262 = vadd.f32 0.0, %v261
  %v263 = vpop.f32.mrf.mxu0
  %264 = vmatprep.mubr.f32.mxu0 0.0
  %265 = vmatmul.mubr.f32.gmra.mxu0 %v124
  %v266 = vpop.f32.mrf.mxu0
  %v267 = vadd.f32 0.0, %v266
  %v268 = vpop.f32.mrf.mxu0
  %269 = vmatprep.mubr.f32.mxu0 0.0
  %270 = vmatmul.mubr.f32.gmra.mxu0 %v125
  %v271 = vpop.f32.mrf.mxu0
  %v272 = vadd.f32 0.0, %v271
  %v273 = vpop.f32.mrf.mxu0
  %274 = vmatprep.mubr.f32.mxu0 0.0
  %275 = vmatmul.mubr.f32.gmra.mxu0 %v126
  %v276 = vpop.f32.mrf.mxu0
  %v277 = vadd.f32 0.0, %v276
  %v278 = vpop.f32.mrf.mxu0
  %279 = vmatprep.mubr.f32.mxu0 0.0
  %280 = vmatmul.mubr.f32.gmra.mxu0 %v127
  %v281 = vpop.f32.mrf.mxu0
  %v282 = vadd.f32 0.0, %v281
  %v283 = vpop.f32.mrf.mxu0
  %284 = vmatprep.mubr.f32.mxu0 0.0
  %285 = vmatmul.mubr.f32.gmra.mxu0 %v128
  %v286 = vpop.f32.mrf.mxu0
  %v287 = vadd.f32 0.0, %v286
  %v288 = vpop.f32.mrf.mxu0
  %289 = vmatprep.mubr.f32.mxu0 0.0
  %290 = vmatmul.mubr.f32.gmra.mxu0 %v129
  %v291 = vpop.f32.mrf.mxu0
  %v292 = vadd.f32 0.0, %v291
  %v293 = vpop.f32.mrf.mxu0
  %294 = vmatprep.mubr.f32.mxu0 0.0
  %295 = vmatmul.mubr.f32.gmra.mxu0 %v130
  %v296 = vpop.f32.mrf.mxu0
  %v297 = vadd.f32 0.0, %v296
  %v298 = vpop.f32.mrf.mxu0
  %299 = vmatprep.mubr.f32.mxu0 0.0
  %300 = vmatmul.mubr.f32.gmra.mxu0 %v131
  %v301 = vpop.f32.mrf.mxu0
  %v302 = vadd.f32 0.0, %v301
  %v303 = vpop.f32.mrf.mxu0
  %304 = vmatprep.mubr.f32.mxu0 0.0
  %305 = vmatmul.mubr.f32.gmra.mxu0 %v132
  %v306 = vpop.f32.mrf.mxu0
  %v307 = vadd.f32 0.0, %v306
  %v308 = vpop.f32.mrf.mxu0
  %309 = vdwg.mxu0
  %v310 = vadd.f32 %v149, %v232
  %v311 = vadd.f32 %v150, %v237
  %v312 = vadd.f32 %v151, %v242
  %v313 = vadd.f32 %v152, %v247
  %v314 = vadd.f32 %v153, %v252
  %v315 = vadd.f32 %v154, %v257
  %v316 = vadd.f32 %v155, %v262
  %v317 = vadd.f32 %v156, %v267
  %v318 = vadd.f32 %v157, %v272
  %v319 = vadd.f32 %v158, %v277
  %v320 = vadd.f32 %v159, %v282
  %v321 = vadd.f32 %v160, %v287
  %v322 = vadd.f32 %v161, %v292
  %v323 = vadd.f32 %v162, %v297
  %v324 = vadd.f32 %v163, %v302
  %v325 = vadd.f32 %v164, %v307
  %326 = vst [vmem:[#allocation2] sm:$0xff] %v310
  %327 = vst [vmem:[#allocation2 + $0x8] sm:$0xff] %v311
  %328 = vst [vmem:[#allocation2 + $0x10] sm:$0xff] %v312
  %329 = vst [vmem:[#allocation2 + $0x18] sm:$0xff] %v313
  %330 = vst [vmem:[#allocation2 + $0x20] sm:$0xff] %v314
  %331 = vst [vmem:[#allocation2 + $0x28] sm:$0xff] %v315
  %332 = vst [vmem:[#allocation2 + $0x30] sm:$0xff] %v316
  %333 = vst [vmem:[#allocation2 + $0x38] sm:$0xff] %v317
  %334 = vst [vmem:[#allocation2 + $0x40] sm:$0xff] %v318
  %335 = vst [vmem:[#allocation2 + $0x48] sm:$0xff] %v319
  %336 = vst [vmem:[#allocation2 + $0x50] sm:$0xff] %v320
  %337 = vst [vmem:[#allocation2 + $0x58] sm:$0xff] %v321
  %338 = vst [vmem:[#allocation2 + $0x60] sm:$0xff] %v322
  %339 = vst [vmem:[#allocation2 + $0x68] sm:$0xff] %v323
  %340 = vst [vmem:[#allocation2 + $0x70] sm:$0xff] %v324
  %341 = vst [vmem:[#allocation2 + $0x78] sm:$0xff] %v325
  %v342 = vld [vmem:[#allocation3] sm:$0xff]
  %v343 = vld [vmem:[#allocation3 + $0x8] sm:$0xff]
  %v344 = vld [vmem:[#allocation3 + $0x10] sm:$0xff]
  %v345 = vld [vmem:[#allocation3 + $0x18] sm:$0xff]
  %v346 = vld [vmem:[#allocation3 + $0x20] sm:$0xff]
  %v347 = vld [vmem:[#allocation3 + $0x28] sm:$0xff]
  %v348 = vld [vmem:[#allocation3 + $0x30] sm:$0xff]
  %v349 = vld [vmem:[#allocation3 + $0x38] sm:$0xff]
  %v350 = vld [vmem:[#allocation3 + $0x40] sm:$0xff]
  %v351 = vld [vmem:[#allocation3 + $0x48] sm:$0xff]
  %v352 = vld [vmem:[#allocation3 + $0x50] sm:$0xff]
  %v353 = vld [vmem:[#allocation3 + $0x58] sm:$0xff]
  %v354 = vld [vmem:[#allocation3 + $0x60] sm:$0xff]
  %v355 = vld [vmem:[#allocation3 + $0x68] sm:$0xff]
  %v356 = vld [vmem:[#allocation3 + $0x70] sm:$0xff]
  %v357 = vld [vmem:[#allocation3 + $0x78] sm:$0xff]
  %358 = vmatprep.subr.mxu0 0.0
  %359 = vmatpush1.msra.mxu0 %v79
  %360 = vmatprep.subr.mxu0 0.0
  %361 = vmatpush1.msra.mxu0 %v78
  %362 = vmatprep.subr.mxu0 0.0
  %363 = vmatpush1.msra.mxu0 %v77
  %364 = vmatprep.subr.mxu0 0.0
  %365 = vmatpush1.msra.mxu0 %v76
  %366 = vmatprep.subr.mxu0 0.0
  %367 = vmatpush1.msra.mxu0 %v75
  %368 = vmatprep.subr.mxu0 0.0
  %369 = vmatpush1.msra.mxu0 %v74
  %370 = vmatprep.subr.mxu0 0.0
  %371 = vmatpush1.msra.mxu0 %v73
  %372 = vmatprep.subr.mxu0 0.0
  %373 = vmatpush1.msra.mxu0 %v72
  %374 = vmatprep.subr.mxu0 0.0
  %375 = vmatpush1.msra.mxu0 %v71
  %376 = vmatprep.subr.mxu0 0.0
  %377 = vmatpush1.msra.mxu0 %v70
  %378 = vmatprep.subr.mxu0 0.0
  %379 = vmatpush1.msra.mxu0 %v69
  %380 = vmatprep.subr.mxu0 0.0
  %381 = vmatpush1.msra.mxu0 %v68
  %382 = vmatprep.subr.mxu0 0.0
  %383 = vmatpush1.msra.mxu0 %v67
  %384 = vmatprep.subr.mxu0 0.0
  %385 = vmatpush1.msra.mxu0 %v66
  %386 = vmatprep.subr.mxu0 0.0
  %387 = vmatpush1.msra.mxu0 %v65
  %388 = vmatprep.subr.mxu0 0.0
  %389 = vmatpush1.msra.mxu0 %v64
  %390 = vmatprep.subr.mxu0 0.0
  %391 = vmatpush2.msra.mxu0 0.0
  %392 = vmatprep.subr.mxu0 0.0
  %393 = vmatpush2.msra.mxu0 0.0
  %394 = vmatprep.subr.mxu0 0.0
  %395 = vmatpush2.msra.mxu0 0.0
  %396 = vmatprep.subr.mxu0 0.0
  %397 = vmatpush2.msra.mxu0 0.0
  %398 = vmatprep.subr.mxu0 0.0
  %399 = vmatpush2.msra.mxu0 0.0
  %400 = vmatprep.subr.mxu0 0.0
  %401 = vmatpush2.msra.mxu0 0.0
  %402 = vmatprep.subr.mxu0 0.0
  %403 = vmatpush2.msra.mxu0 0.0
  %404 = vmatprep.subr.mxu0 0.0
  %405 = vmatpush2.msra.mxu0 0.0
  %406 = vmatprep.subr.mxu0 0.0
  %407 = vmatpush2.msra.mxu0 0.0
  %408 = vmatprep.subr.mxu0 0.0
  %409 = vmatpush2.msra.mxu0 0.0
  %410 = vmatprep.subr.mxu0 0.0
  %411 = vmatpush2.msra.mxu0 0.0
  %412 = vmatprep.subr.mxu0 0.0
  %413 = vmatpush2.msra.mxu0 0.0
  %414 = vmatprep.subr.mxu0 0.0
  %415 = vmatpush2.msra.mxu0 0.0
  %416 = vmatprep.subr.mxu0 0.0
  %417 = vmatpush2.msra.mxu0 0.0
  %418 = vmatprep.subr.mxu0 0.0
  %419 = vmatpush2.msra.mxu0 0.0
  %420 = vmatprep.subr.mxu0 0.0
  %421 = vmatpush2.msra.mxu0 0.0
  %422 = vmatprep.mubr.f32.mxu0 0.0
  %423 = vmatmul.mubr.f32.gmra.mxu0 %v133
  %v424 = vpop.f32.mrf.mxu0
  %v425 = vadd.f32 0.0, %v424
  %v426 = vpop.f32.mrf.mxu0
  %427 = vmatprep.mubr.f32.mxu0 0.0
  %428 = vmatmul.mubr.f32.gmra.mxu0 %v134
  %v429 = vpop.f32.mrf.mxu0
  %v430 = vadd.f32 0.0, %v429
  %v431 = vpop.f32.mrf.mxu0
  %432 = vmatprep.mubr.f32.mxu0 0.0
  %433 = vmatmul.mubr.f32.gmra.mxu0 %v135
  %v434 = vpop.f32.mrf.mxu0
  %v435 = vadd.f32 0.0, %v434
  %v436 = vpop.f32.mrf.mxu0
  %437 = vmatprep.mubr.f32.mxu0 0.0
  %438 = vmatmul.mubr.f32.gmra.mxu0 %v136
  %v439 = vpop.f32.mrf.mxu0
  %v440 = vadd.f32 0.0, %v439
  %v441 = vpop.f32.mrf.mxu0
  %442 = vmatprep.mubr.f32.mxu0 0.0
  %443 = vmatmul.mubr.f32.gmra.mxu0 %v137
  %v444 = vpop.f32.mrf.mxu0
  %v445 = vadd.f32 0.0, %v444
  %v446 = vpop.f32.mrf.mxu0
  %447 = vmatprep.mubr.f32.mxu0 0.0
  %448 = vmatmul.mubr.f32.gmra.mxu0 %v138
  %v449 = vpop.f32.mrf.mxu0
  %v450 = vadd.f32 0.0, %v449
  %v451 = vpop.f32.mrf.mxu0
  %452 = vmatprep.mubr.f32.mxu0 0.0
  %453 = vmatmul.mubr.f32.gmra.mxu0 %v139
  %v454 = vpop.f32.mrf.mxu0
  %v455 = vadd.f32 0.0, %v454
  %v456 = vpop.f32.mrf.mxu0
  %457 = vmatprep.mubr.f32.mxu0 0.0
  %458 = vmatmul.mubr.f32.gmra.mxu0 %v140
  %v459 = vpop.f32.mrf.mxu0
  %v460 = vadd.f32 0.0, %v459
  %v461 = vpop.f32.mrf.mxu0
  %462 = vmatprep.mubr.f32.mxu0 0.0
  %463 = vmatmul.mubr.f32.gmra.mxu0 %v141
  %v464 = vpop.f32.mrf.mxu0
  %v465 = vadd.f32 0.0, %v464
  %v466 = vpop.f32.mrf.mxu0
  %467 = vmatprep.mubr.f32.mxu0 0.0
  %468 = vmatmul.mubr.f32.gmra.mxu0 %v142
  %v469 = vpop.f32.mrf.mxu0
  %v470 = vadd.f32 0.0, %v469
  %v471 = vpop.f32.mrf.mxu0
  %472 = vmatprep.mubr.f32.mxu0 0.0
  %473 = vmatmul.mubr.f32.gmra.mxu0 %v143
  %v474 = vpop.f32.mrf.mxu0
  %v475 = vadd.f32 0.0, %v474
  %v476 = vpop.f32.mrf.mxu0
  %477 = vmatprep.mubr.f32.mxu0 0.0
  %478 = vmatmul.mubr.f32.gmra.mxu0 %v144
  %v479 = vpop.f32.mrf.mxu0
  %v480 = vadd.f32 0.0, %v479
  %v481 = vpop.f32.mrf.mxu0
  %482 = vmatprep.mubr.f32.mxu0 0.0
  %483 = vmatmul.mubr.f32.gmra.mxu0 %v145
  %v484 = vpop.f32.mrf.mxu0
  %v485 = vadd.f32 0.0, %v484
  %v486 = vpop.f32.mrf.mxu0
  %487 = vmatprep.mubr.f32.mxu0 0.0
  %488 = vmatmul.mubr.f32.gmra.mxu0 %v146
  %v489 = vpop.f32.mrf.mxu0
  %v490 = vadd.f32 0.0, %v489
  %v491 = vpop.f32.mrf.mxu0
  %492 = vmatprep.mubr.f32.mxu0 0.0
  %493 = vmatmul.mubr.f32.gmra.mxu0 %v147
  %v494 = vpop.f32.mrf.mxu0
  %v495 = vadd.f32 0.0, %v494
  %v496 = vpop.f32.mrf.mxu0
  %497 = vmatprep.mubr.f32.mxu0 0.0
  %498 = vmatmul.mubr.f32.gmra.mxu0 %v148
  %v499 = vpop.f32.mrf.mxu0
  %v500 = vadd.f32 0.0, %v499
  %v501 = vpop.f32.mrf.mxu0
  %502 = vdwg.mxu0
  %v503 = vadd.f32 %v342, %v425
  %v504 = vadd.f32 %v343, %v430
  %v505 = vadd.f32 %v344, %v435
  %v506 = vadd.f32 %v345, %v440
  %v507 = vadd.f32 %v346, %v445
  %v508 = vadd.f32 %v347, %v450
  %v509 = vadd.f32 %v348, %v455
  %v510 = vadd.f32 %v349, %v460
  %v511 = vadd.f32 %v350, %v465
  %v512 = vadd.f32 %v351, %v470
  %v513 = vadd.f32 %v352, %v475
  %v514 = vadd.f32 %v353, %v480
  %v515 = vadd.f32 %v354, %v485
  %v516 = vadd.f32 %v355, %v490
  %v517 = vadd.f32 %v356, %v495
  %v518 = vadd.f32 %v357, %v500
  %519 = vst [vmem:[#allocation3] sm:$0xff] %v503
  %520 = vst [vmem:[#allocation3 + $0x8] sm:$0xff] %v504
  %521 = vst [vmem:[#allocation3 + $0x10] sm:$0xff] %v505
  %522 = vst [vmem:[#allocation3 + $0x18] sm:$0xff] %v506
  %523 = vst [vmem:[#allocation3 + $0x20] sm:$0xff] %v507
  %524 = vst [vmem:[#allocation3 + $0x28] sm:$0xff] %v508
  %525 = vst [vmem:[#allocation3 + $0x30] sm:$0xff] %v509
  %526 = vst [vmem:[#allocation3 + $0x38] sm:$0xff] %v510
  %527 = vst [vmem:[#allocation3 + $0x40] sm:$0xff] %v511
  %528 = vst [vmem:[#allocation3 + $0x48] sm:$0xff] %v512
  %529 = vst [vmem:[#allocation3 + $0x50] sm:$0xff] %v513
  %530 = vst [vmem:[#allocation3 + $0x58] sm:$0xff] %v514
  %531 = vst [vmem:[#allocation3 + $0x60] sm:$0xff] %v515
  %532 = vst [vmem:[#allocation3 + $0x68] sm:$0xff] %v516
  %533 = vst [vmem:[#allocation3 + $0x70] sm:$0xff] %v517
  %534 = vst [vmem:[#allocation3 + $0x78] sm:$0xff] %v518
  // Predicated region
  $region34: #{gcn_forward.1} parent=0 // pred_check
    %p535 = pneg %p26
  $region35: #{gcn_forward.1} parent=0 // pred_check_branch
    %537 = sbr.rel (%p535) target = $region37
  $region36: #{gcn_forward.1} parent=0 // pred_region
    %s538 = smul.u32 0, 128
    %s539 = scalar_lea.vmem %s0, %s538
    %v540 = vld [vmem:[%s539] sm:$0xff]
    %v541 = vld [vmem:[%s539 + $0x8] sm:$0xff]
    %v542 = vld [vmem:[%s539 + $0x10] sm:$0xff]
    %v543 = vld [vmem:[%s539 + $0x18] sm:$0xff]
    %v544 = vld [vmem:[%s539 + $0x20] sm:$0xff]
    %v545 = vld [vmem:[%s539 + $0x28] sm:$0xff]
    %v546 = vld [vmem:[%s539 + $0x30] sm:$0xff]
    %v547 = vld [vmem:[%s539 + $0x38] sm:$0xff]
    %v548 = vld [vmem:[%s539 + $0x40] sm:$0xff]
    %v549 = vld [vmem:[%s539 + $0x48] sm:$0xff]
    %v550 = vld [vmem:[%s539 + $0x50] sm:$0xff]
    %v551 = vld [vmem:[%s539 + $0x58] sm:$0xff]
    %v552 = vld [vmem:[%s539 + $0x60] sm:$0xff]
    %v553 = vld [vmem:[%s539 + $0x68] sm:$0xff]
    %v554 = vld [vmem:[%s539 + $0x70] sm:$0xff]
    %v555 = vld [vmem:[%s539 + $0x78] sm:$0xff]
    %v556 = vld [vmem:[%s3] sm:$0xff]
    %v557 = vld [vmem:[%s3 + $0x8] sm:$0xff]
    %v558 = vld [vmem:[%s3 + $0x10] sm:$0xff]
    %v559 = vld [vmem:[%s3 + $0x18] sm:$0xff]
    %v560 = vld [vmem:[%s3 + $0x20] sm:$0xff]
    %v561 = vld [vmem:[%s3 + $0x28] sm:$0xff]
    %v562 = vld [vmem:[%s3 + $0x30] sm:$0xff]
    %v563 = vld [vmem:[%s3 + $0x38] sm:$0xff]
    %v564 = vld [vmem:[%s3 + $0x40] sm:$0xff]
    %v565 = vld [vmem:[%s3 + $0x48] sm:$0xff]
    %v566 = vld [vmem:[%s3 + $0x50] sm:$0xff]
    %v567 = vld [vmem:[%s3 + $0x58] sm:$0xff]
    %v568 = vld [vmem:[%s3 + $0x60] sm:$0xff]
    %v569 = vld [vmem:[%s3 + $0x68] sm:$0xff]
    %v570 = vld [vmem:[%s3 + $0x70] sm:$0xff]
    %v571 = vld [vmem:[%s3 + $0x78] sm:$0xff]
    %v572 = vld [vmem:[#allocation2] sm:$0xff]
    %v573 = vld [vmem:[#allocation2 + $0x8] sm:$0xff]
    %v574 = vld [vmem:[#allocation2 + $0x10] sm:$0xff]
    %v575 = vld [vmem:[#allocation2 + $0x18] sm:$0xff]
    %v576 = vld [vmem:[#allocation2 + $0x20] sm:$0xff]
    %v577 = vld [vmem:[#allocation2 + $0x28] sm:$0xff]
    %v578 = vld [vmem:[#allocation2 + $0x30] sm:$0xff]
    %v579 = vld [vmem:[#allocation2 + $0x38] sm:$0xff]
    %v580 = vld [vmem:[#allocation2 + $0x40] sm:$0xff]
    %v581 = vld [vmem:[#allocation2 + $0x48] sm:$0xff]
    %v582 = vld [vmem:[#allocation2 + $0x50] sm:$0xff]
    %v583 = vld [vmem:[#allocation2 + $0x58] sm:$0xff]
    %v584 = vld [vmem:[#allocation2 + $0x60] sm:$0xff]
    %v585 = vld [vmem:[#allocation2 + $0x68] sm:$0xff]
    %v586 = vld [vmem:[#allocation2 + $0x70] sm:$0xff]
    %v587 = vld [vmem:[#allocation2 + $0x78] sm:$0xff]
    %v588 = vld [vmem:[%s4] sm:$0xff]
    %v589 = vld [vmem:[%s4 + $0x8] sm:$0xff]
    %v590 = vld [vmem:[%s4 + $0x10] sm:$0xff]
    %v591 = vld [vmem:[%s4 + $0x18] sm:$0xff]
    %v592 = vld [vmem:[%s4 + $0x20] sm:$0xff]
    %v593 = vld [vmem:[%s4 + $0x28] sm:$0xff]
    %v594 = vld [vmem:[%s4 + $0x30] sm:$0xff]
    %v595 = vld [vmem:[%s4 + $0x38] sm:$0xff]
    %v596 = vld [vmem:[%s4 + $0x40] sm:$0xff]
    %v597 = vld [vmem:[%s4 + $0x48] sm:$0xff]
    %v598 = vld [vmem:[%s4 + $0x50] sm:$0xff]
    %v599 = vld [vmem:[%s4 + $0x58] sm:$0xff]
    %v600 = vld [vmem:[%s4 + $0x60] sm:$0xff]
    %v601 = vld [vmem:[%s4 + $0x68] sm:$0xff]
    %v602 = vld [vmem:[%s4 + $0x70] sm:$0xff]
    %v603 = vld [vmem:[%s4 + $0x78] sm:$0xff]
    %604 = vmatprep.subr.mxu0 0.0
    %605 = vmatpush1.msra.mxu0 %v603
    %606 = vmatprep.subr.mxu0 0.0
    %607 = vmatpush1.msra.mxu0 %v602
    %608 = vmatprep.subr.mxu0 0.0
    %609 = vmatpush1.msra.mxu0 %v601
    %610 = vmatprep.subr.mxu0 0.0
    %611 = vmatpush1.msra.mxu0 %v600
    %612 = vmatprep.subr.mxu0 0.0
    %613 = vmatpush1.msra.mxu0 %v599
    %614 = vmatprep.subr.mxu0 0.0
    %615 = vmatpush1.msra.mxu0 %v598
    %616 = vmatprep.subr.mxu0 0.0
    %617 = vmatpush1.msra.mxu0 %v597
    %618 = vmatprep.subr.mxu0 0.0
    %619 = vmatpush1.msra.mxu0 %v596
    %620 = vmatprep.subr.mxu0 0.0
    %621 = vmatpush1.msra.mxu0 %v595
    %622 = vmatprep.subr.mxu0 0.0
    %623 = vmatpush1.msra.mxu0 %v594
    %624 = vmatprep.subr.mxu0 0.0
    %625 = vmatpush1.msra.mxu0 %v593
    %626 = vmatprep.subr.mxu0 0.0
    %627 = vmatpush1.msra.mxu0 %v592
    %628 = vmatprep.subr.mxu0 0.0
    %629 = vmatpush1.msra.mxu0 %v591
    %630 = vmatprep.subr.mxu0 0.0
    %631 = vmatpush1.msra.mxu0 %v590
    %632 = vmatprep.subr.mxu0 0.0
    %633 = vmatpush1.msra.mxu0 %v589
    %634 = vmatprep.subr.mxu0 0.0
    %635 = vmatpush1.msra.mxu0 %v588
    %636 = vmatprep.subr.mxu0 0.0
    %637 = vmatpush2.msra.mxu0 0.0
    %638 = vmatprep.subr.mxu0 0.0
    %639 = vmatpush2.msra.mxu0 0.0
    %640 = vmatprep.subr.mxu0 0.0
    %641 = vmatpush2.msra.mxu0 0.0
    %642 = vmatprep.subr.mxu0 0.0
    %643 = vmatpush2.msra.mxu0 0.0
    %644 = vmatprep.subr.mxu0 0.0
    %645 = vmatpush2.msra.mxu0 0.0
    %646 = vmatprep.subr.mxu0 0.0
    %647 = vmatpush2.msra.mxu0 0.0
    %648 = vmatprep.subr.mxu0 0.0
    %649 = vmatpush2.msra.mxu0 0.0
    %650 = vmatprep.subr.mxu0 0.0
    %651 = vmatpush2.msra.mxu0 0.0
    %652 = vmatprep.subr.mxu0 0.0
    %653 = vmatpush2.msra.mxu0 0.0
    %654 = vmatprep.subr.mxu0 0.0
    %655 = vmatpush2.msra.mxu0 0.0
    %656 = vmatprep.subr.mxu0 0.0
    %657 = vmatpush2.msra.mxu0 0.0
    %658 = vmatprep.subr.mxu0 0.0
    %659 = vmatpush2.msra.mxu0 0.0
    %660 = vmatprep.subr.mxu0 0.0
    %661 = vmatpush2.msra.mxu0 0.0
    %662 = vmatprep.subr.mxu0 0.0
    %663 = vmatpush2.msra.mxu0 0.0
    %664 = vmatprep.subr.mxu0 0.0
    %665 = vmatpush2.msra.mxu0 0.0
    %666 = vmatprep.subr.mxu0 0.0
    %667 = vmatpush2.msra.mxu0 0.0
    %668 = vmatprep.mubr.f32.mxu0 0.0
    %669 = vmatmul.mubr.f32.gmra.mxu0 %v572
    %v670 = vpop.f32.mrf.mxu0
    %v671 = vadd.f32 0.0, %v670
    %v672 = vpop.f32.mrf.mxu0
    %673 = vmatprep.mubr.f32.mxu0 0.0
    %674 = vmatmul.mubr.f32.gmra.mxu0 %v573
    %v675 = vpop.f32.mrf.mxu0
    %v676 = vadd.f32 0.0, %v675
    %v677 = vpop.f32.mrf.mxu0
    %678 = vmatprep.mubr.f32.mxu0 0.0
    %679 = vmatmul.mubr.f32.gmra.mxu0 %v574
    %v680 = vpop.f32.mrf.mxu0
    %v681 = vadd.f32 0.0, %v680
    %v682 = vpop.f32.mrf.mxu0
    %683 = vmatprep.mubr.f32.mxu0 0.0
    %684 = vmatmul.mubr.f32.gmra.mxu0 %v575
    %v685 = vpop.f32.mrf.mxu0
    %v686 = vadd.f32 0.0, %v685
    %v687 = vpop.f32.mrf.mxu0
    %688 = vmatprep.mubr.f32.mxu0 0.0
    %689 = vmatmul.mubr.f32.gmra.mxu0 %v576
    %v690 = vpop.f32.mrf.mxu0
    %v691 = vadd.f32 0.0, %v690
    %v692 = vpop.f32.mrf.mxu0
    %693 = vmatprep.mubr.f32.mxu0 0.0
    %694 = vmatmul.mubr.f32.gmra.mxu0 %v577
    %v695 = vpop.f32.mrf.mxu0
    %v696 = vadd.f32 0.0, %v695
    %v697 = vpop.f32.mrf.mxu0
    %698 = vmatprep.mubr.f32.mxu0 0.0
    %699 = vmatmul.mubr.f32.gmra.mxu0 %v578
    %v700 = vpop.f32.mrf.mxu0
    %v701 = vadd.f32 0.0, %v700
    %v702 = vpop.f32.mrf.mxu0
    %703 = vmatprep.mubr.f32.mxu0 0.0
    %704 = vmatmul.mubr.f32.gmra.mxu0 %v579
    %v705 = vpop.f32.mrf.mxu0
    %v706 = vadd.f32 0.0, %v705
    %v707 = vpop.f32.mrf.mxu0
    %708 = vmatprep.mubr.f32.mxu0 0.0
    %709 = vmatmul.mubr.f32.gmra.mxu0 %v580
    %v710 = vpop.f32.mrf.mxu0
    %v711 = vadd.f32 0.0, %v710
    %v712 = vpop.f32.mrf.mxu0
    %713 = vmatprep.mubr.f32.mxu0 0.0
    %714 = vmatmul.mubr.f32.gmra.mxu0 %v581
    %v715 = vpop.f32.mrf.mxu0
    %v716 = vadd.f32 0.0, %v715
    %v717 = vpop.f32.mrf.mxu0
    %718 = vmatprep.mubr.f32.mxu0 0.0
    %719 = vmatmul.mubr.f32.gmra.mxu0 %v582
    %v720 = vpop.f32.mrf.mxu0
    %v721 = vadd.f32 0.0, %v720
    %v722 = vpop.f32.mrf.mxu0
    %723 = vmatprep.mubr.f32.mxu0 0.0
    %724 = vmatmul.mubr.f32.gmra.mxu0 %v583
    %v725 = vpop.f32.mrf.mxu0
    %v726 = vadd.f32 0.0, %v725
    %v727 = vpop.f32.mrf.mxu0
    %728 = vmatprep.mubr.f32.mxu0 0.0
    %729 = vmatmul.mubr.f32.gmra.mxu0 %v584
    %v730 = vpop.f32.mrf.mxu0
    %v731 = vadd.f32 0.0, %v730
    %v732 = vpop.f32.mrf.mxu0
    %733 = vmatprep.mubr.f32.mxu0 0.0
    %734 = vmatmul.mubr.f32.gmra.mxu0 %v585
    %v735 = vpop.f32.mrf.mxu0
    %v736 = vadd.f32 0.0, %v735
    %v737 = vpop.f32.mrf.mxu0
    %738 = vmatprep.mubr.f32.mxu0 0.0
    %739 = vmatmul.mubr.f32.gmra.mxu0 %v586
    %v740 = vpop.f32.mrf.mxu0
    %v741 = vadd.f32 0.0, %v740
    %v742 = vpop.f32.mrf.mxu0
    %743 = vmatprep.mubr.f32.mxu0 0.0
    %744 = vmatmul.mubr.f32.gmra.mxu0 %v587
    %v745 = vpop.f32.mrf.mxu0
    %v746 = vadd.f32 0.0, %v745
    %v747 = vpop.f32.mrf.mxu0
    %748 = vdwg.mxu0
    %749 = vmatprep.subr.mxu0 0.0
    %750 = vmatpush1.msra.mxu0 %v571
    %751 = vmatprep.subr.mxu0 0.0
    %752 = vmatpush1.msra.mxu0 %v570
    %753 = vmatprep.subr.mxu0 0.0
    %754 = vmatpush1.msra.mxu0 %v569
    %755 = vmatprep.subr.mxu0 0.0
    %756 = vmatpush1.msra.mxu0 %v568
    %757 = vmatprep.subr.mxu0 0.0
    %758 = vmatpush1.msra.mxu0 %v567
    %759 = vmatprep.subr.mxu0 0.0
    %760 = vmatpush1.msra.mxu0 %v566
    %761 = vmatprep.subr.mxu0 0.0
    %762 = vmatpush1.msra.mxu0 %v565
    %763 = vmatprep.subr.mxu0 0.0
    %764 = vmatpush1.msra.mxu0 %v564
    %765 = vmatprep.subr.mxu0 0.0
    %766 = vmatpush1.msra.mxu0 %v563
    %767 = vmatprep.subr.mxu0 0.0
    %768 = vmatpush1.msra.mxu0 %v562
    %769 = vmatprep.subr.mxu0 0.0
    %770 = vmatpush1.msra.mxu0 %v561
    %771 = vmatprep.subr.mxu0 0.0
    %772 = vmatpush1.msra.mxu0 %v560
    %773 = vmatprep.subr.mxu0 0.0
    %774 = vmatpush1.msra.mxu0 %v559
    %775 = vmatprep.subr.mxu0 0.0
    %776 = vmatpush1.msra.mxu0 %v558
    %777 = vmatprep.subr.mxu0 0.0
    %778 = vmatpush1.msra.mxu0 %v557
    %779 = vmatprep.subr.mxu0 0.0
    %780 = vmatpush1.msra.mxu0 %v556
    %781 = vmatprep.subr.mxu0 0.0
    %782 = vmatpush2.msra.mxu0 0.0
    %783 = vmatprep.subr.mxu0 0.0
    %784 = vmatpush2.msra.mxu0 0.0
    %785 = vmatprep.subr.mxu0 0.0
    %786 = vmatpush2.msra.mxu0 0.0
    %787 = vmatprep.subr.mxu0 0.0
    %788 = vmatpush2.msra.mxu0 0.0
    %789 = vmatprep.subr.mxu0 0.0
    %790 = vmatpush2.msra.mxu0 0.0
    %791 = vmatprep.subr.mxu0 0.0
    %792 = vmatpush2.msra.mxu0 0.0
    %793 = vmatprep.subr.mxu0 0.0
    %794 = vmatpush2.msra.mxu0 0.0
    %795 = vmatprep.subr.mxu0 0.0
    %796 = vmatpush2.msra.mxu0 0.0
    %797 = vmatprep.subr.mxu0 0.0
    %798 = vmatpush2.msra.mxu0 0.0
    %799 = vmatprep.subr.mxu0 0.0
    %800 = vmatpush2.msra.mxu0 0.0
    %801 = vmatprep.subr.mxu0 0.0
    %802 = vmatpush2.msra.mxu0 0.0
    %803 = vmatprep.subr.mxu0 0.0
    %804 = vmatpush2.msra.mxu0 0.0
    %805 = vmatprep.subr.mxu0 0.0
    %806 = vmatpush2.msra.mxu0 0.0
    %807 = vmatprep.subr.mxu0 0.0
    %808 = vmatpush2.msra.mxu0 0.0
    %809 = vmatprep.subr.mxu0 0.0
    %810 = vmatpush2.msra.mxu0 0.0
    %811 = vmatprep.subr.mxu0 0.0
    %812 = vmatpush2.msra.mxu0 0.0
    %813 = vmatprep.mubr.f32.mxu0 0.0
    %814 = vmatmul.mubr.f32.gmra.mxu0 %v540
    %v815 = vpop.f32.mrf.mxu0
    %v816 = vadd.f32 %v671, %v815
    %v817 = vpop.f32.mrf.mxu0
    %818 = vmatprep.mubr.f32.mxu0 0.0
    %819 = vmatmul.mubr.f32.gmra.mxu0 %v541
    %v820 = vpop.f32.mrf.mxu0
    %v821 = vadd.f32 %v676, %v820
    %v822 = vpop.f32.mrf.mxu0
    %823 = vmatprep.mubr.f32.mxu0 0.0
    %824 = vmatmul.mubr.f32.gmra.mxu0 %v542
    %v825 = vpop.f32.mrf.mxu0
    %v826 = vadd.f32 %v681, %v825
    %v827 = vpop.f32.mrf.mxu0
    %828 = vmatprep.mubr.f32.mxu0 0.0
    %829 = vmatmul.mubr.f32.gmra.mxu0 %v543
    %v830 = vpop.f32.mrf.mxu0
    %v831 = vadd.f32 %v686, %v830
    %v832 = vpop.f32.mrf.mxu0
    %833 = vmatprep.mubr.f32.mxu0 0.0
    %834 = vmatmul.mubr.f32.gmra.mxu0 %v544
    %v835 = vpop.f32.mrf.mxu0
    %v836 = vadd.f32 %v691, %v835
    %v837 = vpop.f32.mrf.mxu0
    %838 = vmatprep.mubr.f32.mxu0 0.0
    %839 = vmatmul.mubr.f32.gmra.mxu0 %v545
    %v840 = vpop.f32.mrf.mxu0
    %v841 = vadd.f32 %v696, %v840
    %v842 = vpop.f32.mrf.mxu0
    %843 = vmatprep.mubr.f32.mxu0 0.0
    %844 = vmatmul.mubr.f32.gmra.mxu0 %v546
    %v845 = vpop.f32.mrf.mxu0
    %v846 = vadd.f32 %v701, %v845
    %v847 = vpop.f32.mrf.mxu0
    %848 = vmatprep.mubr.f32.mxu0 0.0
    %849 = vmatmul.mubr.f32.gmra.mxu0 %v547
    %v850 = vpop.f32.mrf.mxu0
    %v851 = vadd.f32 %v706, %v850
    %v852 = vpop.f32.mrf.mxu0
    %853 = vmatprep.mubr.f32.mxu0 0.0
    %854 = vmatmul.mubr.f32.gmra.mxu0 %v548
    %v855 = vpop.f32.mrf.mxu0
    %v856 = vadd.f32 %v711, %v855
    %v857 = vpop.f32.mrf.mxu0
    %858 = vmatprep.mubr.f32.mxu0 0.0
    %859 = vmatmul.mubr.f32.gmra.mxu0 %v549
    %v860 = vpop.f32.mrf.mxu0
    %v861 = vadd.f32 %v716, %v860
    %v862 = vpop.f32.mrf.mxu0
    %863 = vmatprep.mubr.f32.mxu0 0.0
    %864 = vmatmul.mubr.f32.gmra.mxu0 %v550
    %v865 = vpop.f32.mrf.mxu0
    %v866 = vadd.f32 %v721, %v865
    %v867 = vpop.f32.mrf.mxu0
    %868 = vmatprep.mubr.f32.mxu0 0.0
    %869 = vmatmul.mubr.f32.gmra.mxu0 %v551
    %v870 = vpop.f32.mrf.mxu0
    %v871 = vadd.f32 %v726, %v870
    %v872 = vpop.f32.mrf.mxu0
    %873 = vmatprep.mubr.f32.mxu0 0.0
    %874 = vmatmul.mubr.f32.gmra.mxu0 %v552
    %v875 = vpop.f32.mrf.mxu0
    %v876 = vadd.f32 %v731, %v875
    %v877 = vpop.f32.mrf.mxu0
    %878 = vmatprep.mubr.f32.mxu0 0.0
    %879 = vmatmul.mubr.f32.gmra.mxu0 %v553
    %v880 = vpop.f32.mrf.mxu0
    %v881 = vadd.f32 %v736, %v880
    %v882 = vpop.f32.mrf.mxu0
    %883 = vmatprep.mubr.f32.mxu0 0.0
    %884 = vmatmul.mubr.f32.gmra.mxu0 %v554
    %v885 = vpop.f32.mrf.mxu0
    %v886 = vadd.f32 %v741, %v885
    %v887 = vpop.f32.mrf.mxu0
    %888 = vmatprep.mubr.f32.mxu0 0.0
    %889 = vmatmul.mubr.f32.gmra.mxu0 %v555
    %v890 = vpop.f32.mrf.mxu0
    %v891 = vadd.f32 %v746, %v890
    %v892 = vpop.f32.mrf.mxu0
    %893 = vdwg.mxu0
    %v894 = vld [vmem:[#allocation3] sm:$0xff]
    %v895 = vld [vmem:[#allocation3 + $0x8] sm:$0xff]
    %v896 = vld [vmem:[#allocation3 + $0x10] sm:$0xff]
    %v897 = vld [vmem:[#allocation3 + $0x18] sm:$0xff]
    %v898 = vld [vmem:[#allocation3 + $0x20] sm:$0xff]
    %v899 = vld [vmem:[#allocation3 + $0x28] sm:$0xff]
    %v900 = vld [vmem:[#allocation3 + $0x30] sm:$0xff]
    %v901 = vld [vmem:[#allocation3 + $0x38] sm:$0xff]
    %v902 = vld [vmem:[#allocation3 + $0x40] sm:$0xff]
    %v903 = vld [vmem:[#allocation3 + $0x48] sm:$0xff]
    %v904 = vld [vmem:[#allocation3 + $0x50] sm:$0xff]
    %v905 = vld [vmem:[#allocation3 + $0x58] sm:$0xff]
    %v906 = vld [vmem:[#allocation3 + $0x60] sm:$0xff]
    %v907 = vld [vmem:[#allocation3 + $0x68] sm:$0xff]
    %v908 = vld [vmem:[#allocation3 + $0x70] sm:$0xff]
    %v909 = vld [vmem:[#allocation3 + $0x78] sm:$0xff]
    %v910 = vld [vmem:[%s5] sm:$0xff]
    %v911 = vld [vmem:[%s5 + $0x8] sm:$0xff]
    %v912 = vld [vmem:[%s5 + $0x10] sm:$0xff]
    %v913 = vld [vmem:[%s5 + $0x18] sm:$0xff]
    %v914 = vld [vmem:[%s5 + $0x20] sm:$0xff]
    %v915 = vld [vmem:[%s5 + $0x28] sm:$0xff]
    %v916 = vld [vmem:[%s5 + $0x30] sm:$0xff]
    %v917 = vld [vmem:[%s5 + $0x38] sm:$0xff]
    %v918 = vld [vmem:[%s5 + $0x40] sm:$0xff]
    %v919 = vld [vmem:[%s5 + $0x48] sm:$0xff]
    %v920 = vld [vmem:[%s5 + $0x50] sm:$0xff]
    %v921 = vld [vmem:[%s5 + $0x58] sm:$0xff]
    %v922 = vld [vmem:[%s5 + $0x60] sm:$0xff]
    %v923 = vld [vmem:[%s5 + $0x68] sm:$0xff]
    %v924 = vld [vmem:[%s5 + $0x70] sm:$0xff]
    %v925 = vld [vmem:[%s5 + $0x78] sm:$0xff]
    %926 = vmatprep.subr.mxu0 0.0
    %927 = vmatpush1.msra.mxu0 %v925
    %928 = vmatprep.subr.mxu0 0.0
    %929 = vmatpush1.msra.mxu0 %v924
    %930 = vmatprep.subr.mxu0 0.0
    %931 = vmatpush1.msra.mxu0 %v923
    %932 = vmatprep.subr.mxu0 0.0
    %933 = vmatpush1.msra.mxu0 %v922
    %934 = vmatprep.subr.mxu0 0.0
    %935 = vmatpush1.msra.mxu0 %v921
    %936 = vmatprep.subr.mxu0 0.0
    %937 = vmatpush1.msra.mxu0 %v920
    %938 = vmatprep.subr.mxu0 0.0
    %939 = vmatpush1.msra.mxu0 %v919
    %940 = vmatprep.subr.mxu0 0.0
    %941 = vmatpush1.msra.mxu0 %v918
    %942 = vmatprep.subr.mxu0 0.0
    %943 = vmatpush1.msra.mxu0 %v917
    %944 = vmatprep.subr.mxu0 0.0
    %945 = vmatpush1.msra.mxu0 %v916
    %946 = vmatprep.subr.mxu0 0.0
    %947 = vmatpush1.msra.mxu0 %v915
    %948 = vmatprep.subr.mxu0 0.0
    %949 = vmatpush1.msra.mxu0 %v914
    %950 = vmatprep.subr.mxu0 0.0
    %951 = vmatpush1.msra.mxu0 %v913
    %952 = vmatprep.subr.mxu0 0.0
    %953 = vmatpush1.msra.mxu0 %v912
    %954 = vmatprep.subr.mxu0 0.0
    %955 = vmatpush1.msra.mxu0 %v911
    %956 = vmatprep.subr.mxu0 0.0
    %957 = vmatpush1.msra.mxu0 %v910
    %958 = vmatprep.subr.mxu0 0.0
    %959 = vmatpush2.msra.mxu0 0.0
    %960 = vmatprep.subr.mxu0 0.0
    %961 = vmatpush2.msra.mxu0 0.0
    %962 = vmatprep.subr.mxu0 0.0
    %963 = vmatpush2.msra.mxu0 0.0
    %964 = vmatprep.subr.mxu0 0.0
    %965 = vmatpush2.msra.mxu0 0.0
    %966 = vmatprep.subr.mxu0 0.0
    %967 = vmatpush2.msra.mxu0 0.0
    %968 = vmatprep.subr.mxu0 0.0
    %969 = vmatpush2.msra.mxu0 0.0
    %970 = vmatprep.subr.mxu0 0.0
    %971 = vmatpush2.msra.mxu0 0.0
    %972 = vmatprep.subr.mxu0 0.0
    %973 = vmatpush2.msra.mxu0 0.0
    %974 = vmatprep.subr.mxu0 0.0
    %975 = vmatpush2.msra.mxu0 0.0
    %976 = vmatprep.subr.mxu0 0.0
    %977 = vmatpush2.msra.mxu0 0.0
    %978 = vmatprep.subr.mxu0 0.0
    %979 = vmatpush2.msra.mxu0 0.0
    %980 = vmatprep.subr.mxu0 0.0
    %981 = vmatpush2.msra.mxu0 0.0
    %982 = vmatprep.subr.mxu0 0.0
    %983 = vmatpush2.msra.mxu0 0.0
    %984 = vmatprep.subr.mxu0 0.0
    %985 = vmatpush2.msra.mxu0 0.0
    %986 = vmatprep.subr.mxu0 0.0
    %987 = vmatpush2.msra.mxu0 0.0
    %988 = vmatprep.subr.mxu0 0.0
    %989 = vmatpush2.msra.mxu0 0.0
    %990 = vmatprep.mubr.f32.mxu0 0.0
    %991 = vmatmul.mubr.f32.gmra.mxu0 %v894
    %v992 = vpop.f32.mrf.mxu0
    %v993 = vadd.f32 0.0, %v992
    %v994 = vpop.f32.mrf.mxu0
    %995 = vmatprep.mubr.f32.mxu0 0.0
    %996 = vmatmul.mubr.f32.gmra.mxu0 %v895
    %v997 = vpop.f32.mrf.mxu0
    %v998 = vadd.f32 0.0, %v997
    %v999 = vpop.f32.mrf.mxu0
    %1000 = vmatprep.mubr.f32.mxu0 0.0
    %1001 = vmatmul.mubr.f32.gmra.mxu0 %v896
    %v1002 = vpop.f32.mrf.mxu0
    %v1003 = vadd.f32 0.0, %v1002
    %v1004 = vpop.f32.mrf.mxu0
    %1005 = vmatprep.mubr.f32.mxu0 0.0
    %1006 = vmatmul.mubr.f32.gmra.mxu0 %v897
    %v1007 = vpop.f32.mrf.mxu0
    %v1008 = vadd.f32 0.0, %v1007
    %v1009 = vpop.f32.mrf.mxu0
    %1010 = vmatprep.mubr.f32.mxu0 0.0
    %1011 = vmatmul.mubr.f32.gmra.mxu0 %v898
    %v1012 = vpop.f32.mrf.mxu0
    %v1013 = vadd.f32 0.0, %v1012
    %v1014 = vpop.f32.mrf.mxu0
    %1015 = vmatprep.mubr.f32.mxu0 0.0
    %1016 = vmatmul.mubr.f32.gmra.mxu0 %v899
    %v1017 = vpop.f32.mrf.mxu0
    %v1018 = vadd.f32 0.0, %v1017
    %v1019 = vpop.f32.mrf.mxu0
    %1020 = vmatprep.mubr.f32.mxu0 0.0
    %1021 = vmatmul.mubr.f32.gmra.mxu0 %v900
    %v1022 = vpop.f32.mrf.mxu0
    %v1023 = vadd.f32 0.0, %v1022
    %v1024 = vpop.f32.mrf.mxu0
    %1025 = vmatprep.mubr.f32.mxu0 0.0
    %1026 = vmatmul.mubr.f32.gmra.mxu0 %v901
    %v1027 = vpop.f32.mrf.mxu0
    %v1028 = vadd.f32 0.0, %v1027
    %v1029 = vpop.f32.mrf.mxu0
    %1030 = vmatprep.mubr.f32.mxu0 0.0
    %1031 = vmatmul.mubr.f32.gmra.mxu0 %v902
    %v1032 = vpop.f32.mrf.mxu0
    %v1033 = vadd.f32 0.0, %v1032
    %v1034 = vpop.f32.mrf.mxu0
    %1035 = vmatprep.mubr.f32.mxu0 0.0
    %1036 = vmatmul.mubr.f32.gmra.mxu0 %v903
    %v1037 = vpop.f32.mrf.mxu0
    %v1038 = vadd.f32 0.0, %v1037
    %v1039 = vpop.f32.mrf.mxu0
    %1040 = vmatprep.mubr.f32.mxu0 0.0
    %1041 = vmatmul.mubr.f32.gmra.mxu0 %v904
    %v1042 = vpop.f32.mrf.mxu0
    %v1043 = vadd.f32 0.0, %v1042
    %v1044 = vpop.f32.mrf.mxu0
    %1045 = vmatprep.mubr.f32.mxu0 0.0
    %1046 = vmatmul.mubr.f32.gmra.mxu0 %v905
    %v1047 = vpop.f32.mrf.mxu0
    %v1048 = vadd.f32 0.0, %v1047
    %v1049 = vpop.f32.mrf.mxu0
    %1050 = vmatprep.mubr.f32.mxu0 0.0
    %1051 = vmatmul.mubr.f32.gmra.mxu0 %v906
    %v1052 = vpop.f32.mrf.mxu0
    %v1053 = vadd.f32 0.0, %v1052
    %v1054 = vpop.f32.mrf.mxu0
    %1055 = vmatprep.mubr.f32.mxu0 0.0
    %1056 = vmatmul.mubr.f32.gmra.mxu0 %v907
    %v1057 = vpop.f32.mrf.mxu0
    %v1058 = vadd.f32 0.0, %v1057
    %v1059 = vpop.f32.mrf.mxu0
    %1060 = vmatprep.mubr.f32.mxu0 0.0
    %1061 = vmatmul.mubr.f32.gmra.mxu0 %v908
    %v1062 = vpop.f32.mrf.mxu0
    %v1063 = vadd.f32 0.0, %v1062
    %v1064 = vpop.f32.mrf.mxu0
    %1065 = vmatprep.mubr.f32.mxu0 0.0
    %1066 = vmatmul.mubr.f32.gmra.mxu0 %v909
    %v1067 = vpop.f32.mrf.mxu0
    %v1068 = vadd.f32 0.0, %v1067
    %v1069 = vpop.f32.mrf.mxu0
    %1070 = vdwg.mxu0
    %v1071 = vadd.f32 %v816, %v993
    %v1072 = vadd.f32 %v821, %v998
    %v1073 = vadd.f32 %v826, %v1003
    %v1074 = vadd.f32 %v831, %v1008
    %v1075 = vadd.f32 %v836, %v1013
    %v1076 = vadd.f32 %v841, %v1018
    %v1077 = vadd.f32 %v846, %v1023
    %v1078 = vadd.f32 %v851, %v1028
    %v1079 = vadd.f32 %v856, %v1033
    %v1080 = vadd.f32 %v861, %v1038
    %v1081 = vadd.f32 %v866, %v1043
    %v1082 = vadd.f32 %v871, %v1048
    %v1083 = vadd.f32 %v876, %v1053
    %v1084 = vadd.f32 %v881, %v1058
    %v1085 = vadd.f32 %v886, %v1063
    %v1086 = vadd.f32 %v891, %v1068
    %v1087 = vld [vmem:[%s6] sm:$0x1]
    %v1089 = vlaneseq
    %v1090 = vshrl.u32 %v1089, 7
    %v1091 = vsub.s32 0, %v1090
    %v1092 = vrot.slane %v1087, %v1091
    %v1094 = vadd.f32 %v1071, %v1092
    %v1095 = vadd.f32 %v1072, %v1092
    %v1096 = vadd.f32 %v1073, %v1092
    %v1097 = vadd.f32 %v1074, %v1092
    %v1098 = vadd.f32 %v1075, %v1092
    %v1099 = vadd.f32 %v1076, %v1092
    %v1100 = vadd.f32 %v1077, %v1092
    %v1101 = vadd.f32 %v1078, %v1092
    %v1102 = vadd.f32 %v1079, %v1092
    %v1103 = vadd.f32 %v1080, %v1092
    %v1104 = vadd.f32 %v1081, %v1092
    %v1105 = vadd.f32 %v1082, %v1092
    %v1106 = vadd.f32 %v1083, %v1092
    %v1107 = vadd.f32 %v1084, %v1092
    %v1108 = vadd.f32 %v1085, %v1092
    %v1109 = vadd.f32 %v1086, %v1092
    %v1110 = vmax.f32 %v1094, 0.0
    %v1111 = vmax.f32 %v1095, 0.0
    %v1112 = vmax.f32 %v1096, 0.0
    %v1113 = vmax.f32 %v1097, 0.0
    %v1114 = vmax.f32 %v1098, 0.0
    %v1115 = vmax.f32 %v1099, 0.0
    %v1116 = vmax.f32 %v1100, 0.0
    %v1117 = vmax.f32 %v1101, 0.0
    %v1118 = vmax.f32 %v1102, 0.0
    %v1119 = vmax.f32 %v1103, 0.0
    %v1120 = vmax.f32 %v1104, 0.0
    %v1121 = vmax.f32 %v1105, 0.0
    %v1122 = vmax.f32 %v1106, 0.0
    %v1123 = vmax.f32 %v1107, 0.0
    %v1124 = vmax.f32 %v1108, 0.0
    %v1125 = vmax.f32 %v1109, 0.0
    %1126 = vst [vmem:[%s7] sm:$0xff] %v1110
    %1127 = vst [vmem:[%s7 + $0x8] sm:$0xff] %v1111
    %1128 = vst [vmem:[%s7 + $0x10] sm:$0xff] %v1112
    %1129 = vst [vmem:[%s7 + $0x18] sm:$0xff] %v1113
    %1130 = vst [vmem:[%s7 + $0x20] sm:$0xff] %v1114
    %1131 = vst [vmem:[%s7 + $0x28] sm:$0xff] %v1115
    %1132 = vst [vmem:[%s7 + $0x30] sm:$0xff] %v1116
    %1133 = vst [vmem:[%s7 + $0x38] sm:$0xff] %v1117
    %1134 = vst [vmem:[%s7 + $0x40] sm:$0xff] %v1118
    %1135 = vst [vmem:[%s7 + $0x48] sm:$0xff] %v1119
    %1136 = vst [vmem:[%s7 + $0x50] sm:$0xff] %v1120
    %1137 = vst [vmem:[%s7 + $0x58] sm:$0xff] %v1121
    %1138 = vst [vmem:[%s7 + $0x60] sm:$0xff] %v1122
    %1139 = vst [vmem:[%s7 + $0x68] sm:$0xff] %v1123
    %1140 = vst [vmem:[%s7 + $0x70] sm:$0xff] %v1124
    %1141 = vst [vmem:[%s7 + $0x78] sm:$0xff] %v1125
  $region37: #{gcn_forward.1} parent=0 // pred_fallthru
    _
  // Predicated region
  $region38: #{gcn_forward.1} parent=0 // pred_check
    _
  $region39: #{gcn_forward.1} parent=0 // pred_check_branch
    %1143 = sbr.rel (0) target = $region41
  $region40: #{gcn_forward.1} parent=0 // pred_region
    _
  $region41: #{gcn_forward.1} parent=0 // pred_fallthru
    _
  // Predicated region
  $region42: #{gcn_forward.1} parent=0 // pred_check
    _
  $region43: #{gcn_forward.1} parent=0 // pred_check_branch
    %1145 = sbr.rel (0) target = $region45
  $region44: #{gcn_forward.1} parent=0 // pred_region
    _
  $region45: #{gcn_forward.1} parent=0 // pred_fallthru
    _

</llo_original>
